<compile_context>
chip_gen: v7x
topology: tpu7x:2x2x1
jax: 0.10.0
libtpu: 0.0.40
codegen_flags: <defaults>
</compile_context>

<pallas_src>
import jax
import jax.numpy as jnp
from jax.experimental import pallas as pl
from jax.experimental.pallas import tpu as pltpu


# ---------------------------------------------------------------------------
# Kernels
# ---------------------------------------------------------------------------
def _gconv1_kernel(a_ref, xc_ref, xr_ref, w1r_ref, w1s_ref, b1_ref,
                   w2r_ref, w2s_ref, b2_ref, hw2r_ref, root_ref, acc_ref):
    """Layer 1 + layer-2 weight projections for one (row tile, column tile) step.

    a_ref   : (tm, tk) int8   adjacency tile
    xc_ref  : (tk, F)  bf16   node features, column block (aggregation RHS)
    xr_ref  : (tm, F)  bf16   node features, row block (root term)
    w1r_ref : (F, H)   f32    W1_rel^T
    w1s_ref : (F, H)   f32    W1_root^T
    b1_ref  : (1, H)   f32
    w2r_ref : (H, C)   f32    W2_rel^T
    w2s_ref : (H, C)   f32    W2_root^T
    b2_ref  : (1, C)   f32
    outputs : hw2r (tm, C) bf16 = h @ W2_rel^T   (aggregated by A in call 2)
              root (tm, C) f32  = h @ W2_root^T + b2
    scratch : acc (tm, F) f32   neighbor-aggregation accumulator
    """
    k = pl.program_id(1)

    @pl.when(k == 0)
    def _init():
        acc_ref[...] = jnp.zeros_like(acc_ref)

    # int8 tile -> bf16 right before the dot; fp32 accumulation on the MXU.
    a = a_ref[...].astype(jnp.bfloat16)
    acc_ref[...] += jnp.dot(a, xc_ref[...], preferred_element_type=jnp.float32)

    @pl.when(k == pl.num_programs(1) - 1)
    def _finalize():
        agg1 = acc_ref[...]                              # (tm, F) f32
        xr = xr_ref[...].astype(jnp.float32)             # (tm, F)
        # Two accumulated dots instead of a lane-axis concat (rides MXU slack).
        h = (jnp.dot(agg1, w1r_ref[...], preferred_element_type=jnp.float32)
             + jnp.dot(xr, w1s_ref[...], preferred_element_type=jnp.float32)
             + b1_ref[...])
        h = jnp.maximum(h, 0.0)                          # ReLU
        # F.dropout is identity at inference (training would use pltpu.prng_random_bits).
        hw2r_ref[...] = jnp.dot(
            h, w2r_ref[...], preferred_element_type=jnp.float32).astype(hw2r_ref.dtype)
        root_ref[...] = (jnp.dot(h, w2s_ref[...], preferred_element_type=jnp.float32)
                         + b2_ref[...])


def _gconv2_kernel(a_ref, hw2r_ref, root_ref, o_ref, acc_ref):
    """Layer-2 aggregation + root/bias + log_softmax for one (row, column) step.

    a_ref    : (tm, tk) int8   adjacency tile
    hw2r_ref : (tk, C)  bf16   column block of h @ W2_rel^T
    root_ref : (tm, C)  f32    row block of h @ W2_root^T + b2
    o_ref    : (tm, C)  f32    log-probabilities
    scratch  : acc (tm, C) f32
    """
    k = pl.program_id(1)

    @pl.when(k == 0)
    def _init():
        acc_ref[...] = jnp.zeros_like(acc_ref)

    a = a_ref[...].astype(jnp.bfloat16)
    acc_ref[...] += jnp.dot(a, hw2r_ref[...], preferred_element_type=jnp.float32)

    @pl.when(k == pl.num_programs(1) - 1)
    def _finalize():
        z = acc_ref[...] + root_ref[...]
        # Numerically-stable log_softmax over classes (dim=1).
        m = jnp.max(z, axis=1, keepdims=True)
        zs = z - m
        lse = jnp.log(jnp.sum(jnp.exp(zs), axis=1, keepdims=True))
        o_ref[...] = zs - lse


# ---------------------------------------------------------------------------
# Tiling / VMEM budgeting (generation-aware)
# ---------------------------------------------------------------------------
def _padded_tile_bytes(rows, cols, itemsize):
    pr = -(-rows // 8) * 8
    pc = -(-cols // 128) * 128
    return pr * pc * itemsize


def _vmem_budget():
    """Scoped-VMEM budget: ~56 MiB on 64-MiB parts (v7x), ~105 MiB on 128-MiB parts."""
    cap = 64 * 2 ** 20                      # conservative fallback
    try:
        cap = int(pltpu.get_tpu_info().vmem_capacity_bytes)
    except Exception:
        pass
    return int(max(32 * 2 ** 20, min(cap - 8 * 2 ** 20, cap * 0.85)))


def _block_bytes(tm, tk, f_in, hidden, c):
    """Worst-case per-step VMEM across both calls (everything double-buffered)."""
    by = 0
    by += 2 * _padded_tile_bytes(tm, tk, 1)                  # A tile (int8)
    by += 2 * _padded_tile_bytes(tk, f_in, 2)                # x column block (bf16)
    by += 2 * _padded_tile_bytes(tm, f_in, 2)                # x row block (bf16)
    by += 2 * (2 * _padded_tile_bytes(f_in, hidden, 4)
               + _padded_tile_bytes(1, hidden, 4))           # W1 rel/root + b1
    by += 2 * (2 * _padded_tile_bytes(hidden, c, 4)
               + _padded_tile_bytes(1, c, 4))                # W2 rel/root + b2
    by += 2 * _padded_tile_bytes(tm, c, 2)                   # hw2r out (bf16)
    by += 4 * _padded_tile_bytes(tm, c, 4)                   # root out + logits out
    by += 2 * _padded_tile_bytes(tk, c, 2)                   # hw2r in (call 2)
    by += _padded_tile_bytes(tm, max(f_in, c), 4)            # accumulator scratch
    return by


def _pick_col_tile(n, cap):
    for tk in (2048, 1024, 512, 256, 128):                   # lane dim: multiples of 128
        if tk <= cap and n % tk == 0:
            return tk
    return n                                                 # full-extent block is legal


def _pick_row_tile(n, tk, f_in, hidden, c, budget, cap):
    # Prefer multiples of 32 (int8 A packs 32 rows per sublane group).
    for tm in (1024, 512, 384, 256, 192, 128, 96, 64, 32):
        if tm <= cap and n % tm == 0 and _block_bytes(tm, tk, f_in, hidden, c) <= 0.8 * budget:
            return tm
    for tm in (16, 8):                                       # aligned but slower fallback
        if tm <= cap and n % tm == 0:
            return tm
    return n                                                 # full-extent block is legal


# ---------------------------------------------------------------------------
# Wrapper
# ---------------------------------------------------------------------------
def prepare_params(params):
    """One-time weight layout prep (hoisted out of the per-call hot path)."""
    f32 = jnp.float32
    return {
        "w1_rel_t": params["w1_rel"].T.astype(f32),      # (F, H)
        "w1_root_t": params["w1_root"].T.astype(f32),    # (F, H)
        "b1": params["b1"].reshape(1, -1).astype(f32),   # (1, H)
        "w2_rel_t": params["w2_rel"].T.astype(f32),      # (H, C)
        "w2_root_t": params["w2_root"].T.astype(f32),    # (H, C)
        "b2": params["b2"].reshape(1, -1).astype(f32),   # (1, C)
    }


def net_forward(x, edge_index, prep, *, row_tile_cap=512, col_tile_cap=2048):
    """x: (N, F) float, edge_index: (2, E) int32 (row 0 = src, row 1 = dst)."""
    n, f_in = x.shape
    hidden = prep["b1"].shape[1]
    num_classes = prep["b2"].shape[1]

    # Dense adjacency built DIRECTLY in int8 (no f32 intermediate, no cast pass):
    # A[dst, src] += 1  == PyG "add" aggregation.  Exact for multiplicities <= 127.
    src, dst = edge_index[0], edge_index[1]
    adj_i8 = jnp.zeros((n, n), jnp.int8).at[dst, src].add(jnp.int8(1))
    # TODO(synk): for genuinely sparse graphs, replace densification with a
    # scalar-prefetch (PrefetchScalarGridSpec) CSR / edge-list gather.

    x_b = x.astype(jnp.bfloat16)          # single bf16 copy; used as row AND column views

    budget = _vmem_budget()
    tk = _pick_col_tile(n, col_tile_cap)
    tm = _pick_row_tile(n, tk, f_in, hidden, num_classes, budget, row_tile_cap)
    grid = (n // tm, n // tk)             # rows parallel, K-reduction last ("arbitrary")

    cparams = pltpu.CompilerParams(
        dimension_semantics=("parallel", "arbitrary"),
        vmem_limit_bytes=budget,
    )

    a_spec = pl.BlockSpec((tm, tk), lambda i, k: (i, k))
    x_col_spec = pl.BlockSpec((tk, f_in), lambda i, k: (k, 0))
    x_row_spec = pl.BlockSpec((tm, f_in), lambda i, k: (i, 0))
    rows_out = lambda w: pl.BlockSpec((tm, w), lambda i, k: (i, 0))
    full = lambda r, w: pl.BlockSpec((r, w), lambda i, k: (0, 0))

    # ---- Layer 1 (+ fused layer-2 weight projections) ----
    hw2r, root2 = pl.pallas_call(
        _gconv1_kernel,
        out_shape=(jax.ShapeDtypeStruct((n, num_classes), jnp.bfloat16),
                   jax.ShapeDtypeStruct((n, num_classes), jnp.float32)),
        grid_spec=pltpu.PrefetchScalarGridSpec(
            num_scalar_prefetch=0,
            grid=grid,
            in_specs=[a_spec, x_col_spec, x_row_spec,
                      full(f_in, hidden), full(f_in, hidden), full(1, hidden),
                      full(hidden, num_classes), full(hidden, num_classes),
                      full(1, num_classes)],
            out_specs=(rows_out(num_classes), rows_out(num_classes)),
            scratch_shapes=[pltpu.VMEM((tm, f_in), jnp.float32)]),
        compiler_params=cparams,
    )(adj_i8, x_b, x_b, prep["w1_rel_t"], prep["w1_root_t"], prep["b1"],
      prep["w2_rel_t"], prep["w2_root_t"], prep["b2"])

    # ---- Layer 2 aggregation + log_softmax ----
    out = pl.pallas_call(
        _gconv2_kernel,
        out_shape=jax.ShapeDtypeStruct((n, num_classes), jnp.float32),
        grid_spec=pltpu.PrefetchScalarGridSpec(
            num_scalar_prefetch=0,
            grid=grid,
            in_specs=[a_spec,
                      pl.BlockSpec((tk, num_classes), lambda i, k: (k, 0)),
                      rows_out(num_classes)],
            out_specs=rows_out(num_classes),
            scratch_shapes=[pltpu.VMEM((tm, num_classes), jnp.float32)]),
        compiler_params=cparams,
    )(adj_i8, hw2r, root2)
    return out


# ---------------------------------------------------------------------------
# Params / reference
# ---------------------------------------------------------------------------
def init_params(key, num_node_features, hidden, num_classes):
    """Glorot-uniform-ish init matching GraphConv's (fan_out, fan_in) parameter shapes."""
    ks = jax.random.split(key, 4)

    def glorot(k, fan_out, fan_in):
        lim = (6.0 / (fan_in + fan_out)) ** 0.5
        return jax.random.uniform(k, (fan_out, fan_in), jnp.float32, -lim, lim)

    return {
        "w1_rel": glorot(ks[0], hidden, num_node_features),
        "w1_root": glorot(ks[1], hidden, num_node_features),
        "b1": jnp.zeros((hidden,), jnp.float32),
        "w2_rel": glorot(ks[2], num_classes, hidden),
        "w2_root": glorot(ks[3], num_classes, hidden),
        "b2": jnp.zeros((num_classes,), jnp.float32),
    }


def _reference(x, edge_index, params):
    """Pure-JAX reference mirroring the kernel's mixed-precision recipe
    (bf16 adjacency/aggregation inputs, bf16 hw2r, fp32 accumulation & weights)."""
    n = x.shape[0]
    src, dst = edge_index[0], edge_index[1]
    adj_b = jnp.zeros((n, n), jnp.float32).at[dst, src].add(1.0).astype(jnp.bfloat16)
    x_b = x.astype(jnp.bfloat16)

    agg1 = jnp.dot(adj_b, x_b, preferred_element_type=jnp.float32)
    h = (agg1 @ params["w1_rel"].T
         + x_b.astype(jnp.float32) @ params["w1_root"].T
         + params["b1"])
    h = jnp.maximum(h, 0.0)

    hw2r = (h @ params["w2_rel"].T).astype(jnp.bfloat16)
    z = (jnp.dot(adj_b, hw2r, preferred_element_type=jnp.float32)
         + h @ params["w2_root"].T + params["b2"])
    return jax.nn.log_softmax(z, axis=1)


# ---------------------------------------------------------------------------
# Main
# ---------------------------------------------------------------------------
if __name__ == "__main__":
    key = jax.random.PRNGKey(0)
    k_x, k_e, k_p = jax.random.split(key, 3)

    num_nodes = 256           # with caps below: tm=128, tk=128 -> grid (2, 2)
    num_node_features = 4
    hidden = 16
    num_classes = 4
    num_edges = 2048

    x = jax.random.normal(k_x, (num_nodes, num_node_features), jnp.float32)
    edge_index = jax.random.randint(k_e, (2, num_edges), 0, num_nodes, jnp.int32)

    # int8 exactness guard: per-(dst, src) edge multiplicity must stay <= 127.
    counts = jnp.zeros((num_nodes, num_nodes), jnp.int32).at[
        edge_index[1], edge_index[0]].add(1)
    assert int(jnp.max(counts)) <= 127

    params = init_params(k_p, num_node_features, hidden, num_classes)
    prep = prepare_params(params)      # weight packing hoisted out of the hot path

    # Small tile caps so the test exercises both the parallel row axis and the
    # K-reduction accumulator path; production uses the larger defaults.
    out = net_forward(x, edge_index, prep, row_tile_cap=128, col_tile_cap=128)
    out = jax.block_until_ready(out)

    assert out.shape == (num_nodes, num_classes)
    # log_softmax rows should exponentiate-sum to 1
    row_sums = jnp.sum(jnp.exp(out), axis=1)
    assert bool(jnp.all(jnp.abs(row_sums - 1.0) < 1e-4))
    # match the pure-JAX reference (same precision recipe)
    ref = _reference(x, edge_index, params)
    assert bool(jnp.all(jnp.abs(out - ref) < 2e-2))

    print("KERNEL_OK")
</pallas_src>

<mosaic_0001>
module attributes {stable_mosaic.version = 11 : i64} {
  func.func @_gconv1_kernel(%arg0: i32, %arg1: i32, %arg2: memref<128x128xi8, #tpu.memory_space<vmem>>, %arg3: memref<128x4xbf16, #tpu.memory_space<vmem>>, %arg4: memref<128x4xbf16, #tpu.memory_space<vmem>>, %arg5: memref<4x16xf32, #tpu.memory_space<vmem>>, %arg6: memref<4x16xf32, #tpu.memory_space<vmem>>, %arg7: memref<1x16xf32, #tpu.memory_space<vmem>>, %arg8: memref<16x4xf32, #tpu.memory_space<vmem>>, %arg9: memref<16x4xf32, #tpu.memory_space<vmem>>, %arg10: memref<1x4xf32, #tpu.memory_space<vmem>>, %arg11: memref<128x4xbf16, #tpu.memory_space<vmem>>, %arg12: memref<128x4xf32, #tpu.memory_space<vmem>>, %arg13: memref<128x4xf32, #tpu.memory_space<vmem>>) attributes {dimension_semantics = [#tpu.dimension_semantics<parallel>, #tpu.dimension_semantics<arbitrary>], iteration_bounds = array<i64: 2, 2>, scalar_prefetch = 0 : i64, scratch_operands = 1 : i64, tpu.core_type = #tpu.core_type<tc>, window_params = [{transform_indices = @transform_0, window_bounds = array<i64: 128, 128>}, {transform_indices = @transform_1, window_bounds = array<i64: 128, 4>}, {transform_indices = @transform_2, window_bounds = array<i64: 128, 4>}, {pipeline_mode = #tpu.pipeline_mode<synchronous>, transform_indices = @transform_3, window_bounds = array<i64: 4, 16>}, {pipeline_mode = #tpu.pipeline_mode<synchronous>, transform_indices = @transform_4, window_bounds = array<i64: 4, 16>}, {pipeline_mode = #tpu.pipeline_mode<synchronous>, transform_indices = @transform_5, window_bounds = array<i64: 1, 16>}, {pipeline_mode = #tpu.pipeline_mode<synchronous>, transform_indices = @transform_6, window_bounds = array<i64: 16, 4>}, {pipeline_mode = #tpu.pipeline_mode<synchronous>, transform_indices = @transform_7, window_bounds = array<i64: 16, 4>}, {pipeline_mode = #tpu.pipeline_mode<synchronous>, transform_indices = @transform_8, window_bounds = array<i64: 1, 4>}, {transform_indices = @transform_9, window_bounds = array<i64: 128, 4>}, {transform_indices = @transform_10, window_bounds = array<i64: 128, 4>}]} {
    %c0_i32 = arith.constant 0 : i32
    %0 = arith.cmpi eq, %arg1, %c0_i32 : i32
    %1 = arith.extui %0 : i1 to i32
    %c0_i32_0 = arith.constant 0 : i32
    %2 = arith.cmpi ne, %1, %c0_i32_0 : i32
    scf.if %2 {
      %cst_9 = arith.constant 0.000000e+00 : f32
      %13 = vector.broadcast %cst_9 : f32 to vector<128x4xf32>
      %c0_10 = arith.constant 0 : index
      %c0_11 = arith.constant 0 : index
      %14 = vector.load %arg13[%c0_10, %c0_11] : memref<128x4xf32, #tpu.memory_space<vmem>>, vector<128x4xf32>
      tpu.vector_store %arg13[%c0_10, %c0_11], %13 {strides = array<i32>} : memref<128x4xf32, #tpu.memory_space<vmem>>, vector<128x4xf32>,
    } else {
    }
    %c0 = arith.constant 0 : index
    %c0_1 = arith.constant 0 : index
    %3 = vector.load %arg2[%c0, %c0_1] : memref<128x128xi8, #tpu.memory_space<vmem>>, vector<128x128xi8>
    %4 = arith.sitofp %3 : vector<128x128xi8> to vector<128x128xbf16>
    %c0_2 = arith.constant 0 : index
    %c0_3 = arith.constant 0 : index
    %5 = vector.load %arg13[%c0_2, %c0_3] : memref<128x4xf32, #tpu.memory_space<vmem>>, vector<128x4xf32>
    %c0_4 = arith.constant 0 : index
    %c0_5 = arith.constant 0 : index
    %6 = vector.load %arg3[%c0_4, %c0_5] : memref<128x4xbf16, #tpu.memory_space<vmem>>, vector<128x4xbf16>
    %cst = arith.constant dense<0.000000e+00> : vector<128x4xf32>
    %7 = tpu.matmul %4, %6, %cst {dimension_numbers = #tpu.dot_dimension_numbers<[1], [0], [0], [1], [0, 0, 1, 1], [], []>} : vector<128x128xbf16>, vector<128x4xbf16>, vector<128x4xf32> -> vector<128x4xf32>
    %8 = arith.addf %5, %7 : vector<128x4xf32>
    %c0_6 = arith.constant 0 : index
    %c0_7 = arith.constant 0 : index
    %9 = vector.load %arg13[%c0_6, %c0_7] : memref<128x4xf32, #tpu.memory_space<vmem>>, vector<128x4xf32>
    tpu.vector_store %arg13[%c0_6, %c0_7], %8 {strides = array<i32>} : memref<128x4xf32, #tpu.memory_space<vmem>>, vector<128x4xf32>,
    %c1_i32 = arith.constant 1 : i32
    %10 = arith.cmpi eq, %arg1, %c1_i32 : i32
    %11 = arith.extui %10 : i1 to i32
    %c0_i32_8 = arith.constant 0 : i32
    %12 = arith.cmpi ne, %11, %c0_i32_8 : i32
    scf.if %12 {
      %c0_9 = arith.constant 0 : index
      %c0_10 = arith.constant 0 : index
      %13 = vector.load %arg13[%c0_9, %c0_10] : memref<128x4xf32, #tpu.memory_space<vmem>>, vector<128x4xf32>
      %c0_11 = arith.constant 0 : index
      %c0_12 = arith.constant 0 : index
      %14 = vector.load %arg4[%c0_11, %c0_12] : memref<128x4xbf16, #tpu.memory_space<vmem>>, vector<128x4xbf16>
      %15 = arith.extf %14 : vector<128x4xbf16> to vector<128x4xf32>
      %c0_13 = arith.constant 0 : index
      %c0_14 = arith.constant 0 : index
      %16 = vector.load %arg5[%c0_13, %c0_14] : memref<4x16xf32, #tpu.memory_space<vmem>>, vector<4x16xf32>
      %cst_15 = arith.constant dense<0.000000e+00> : vector<128x16xf32>
      %17 = tpu.matmul %13, %16, %cst_15 {dimension_numbers = #tpu.dot_dimension_numbers<[1], [0], [0], [1], [0, 0, 1, 1], [], []>} : vector<128x4xf32>, vector<4x16xf32>, vector<128x16xf32> -> vector<128x16xf32>
      %c0_16 = arith.constant 0 : index
      %c0_17 = arith.constant 0 : index
      %18 = vector.load %arg6[%c0_16, %c0_17] : memref<4x16xf32, #tpu.memory_space<vmem>>, vector<4x16xf32>
      %cst_18 = arith.constant dense<0.000000e+00> : vector<128x16xf32>
      %19 = tpu.matmul %15, %18, %cst_18 {dimension_numbers = #tpu.dot_dimension_numbers<[1], [0], [0], [1], [0, 0, 1, 1], [], []>} : vector<128x4xf32>, vector<4x16xf32>, vector<128x16xf32> -> vector<128x16xf32>
      %20 = arith.addf %17, %19 : vector<128x16xf32>
      %c0_19 = arith.constant 0 : index
      %c0_20 = arith.constant 0 : index
      %21 = vector.load %arg7[%c0_19, %c0_20] : memref<1x16xf32, #tpu.memory_space<vmem>>, vector<1x16xf32>
      %22 = vector.broadcast %21 : vector<1x16xf32> to vector<128x16xf32>
      %23 = arith.addf %20, %22 : vector<128x16xf32>
      %cst_21 = arith.constant 0.000000e+00 : f32
      %24 = vector.broadcast %cst_21 : f32 to vector<128x16xf32>
      %25 = arith.maximumf %23, %24 : vector<128x16xf32>
      %c0_22 = arith.constant 0 : index
      %c0_23 = arith.constant 0 : index
      %26 = vector.load %arg8[%c0_22, %c0_23] : memref<16x4xf32, #tpu.memory_space<vmem>>, vector<16x4xf32>
      %cst_24 = arith.constant dense<0.000000e+00> : vector<128x4xf32>
      %27 = tpu.matmul %25, %26, %cst_24 {dimension_numbers = #tpu.dot_dimension_numbers<[1], [0], [0], [1], [0, 0, 1, 1], [], []>} : vector<128x16xf32>, vector<16x4xf32>, vector<128x4xf32> -> vector<128x4xf32>
      %28 = arith.truncf %27 : vector<128x4xf32> to vector<128x4xbf16>
      %c0_25 = arith.constant 0 : index
      %c0_26 = arith.constant 0 : index
      %29 = vector.load %arg11[%c0_25, %c0_26] : memref<128x4xbf16, #tpu.memory_space<vmem>>, vector<128x4xbf16>
      tpu.vector_store %arg11[%c0_25, %c0_26], %28 {strides = array<i32>} : memref<128x4xbf16, #tpu.memory_space<vmem>>, vector<128x4xbf16>,
      %c0_27 = arith.constant 0 : index
      %c0_28 = arith.constant 0 : index
      %30 = vector.load %arg9[%c0_27, %c0_28] : memref<16x4xf32, #tpu.memory_space<vmem>>, vector<16x4xf32>
      %cst_29 = arith.constant dense<0.000000e+00> : vector<128x4xf32>
      %31 = tpu.matmul %25, %30, %cst_29 {dimension_numbers = #tpu.dot_dimension_numbers<[1], [0], [0], [1], [0, 0, 1, 1], [], []>} : vector<128x16xf32>, vector<16x4xf32>, vector<128x4xf32> -> vector<128x4xf32>
      %c0_30 = arith.constant 0 : index
      %c0_31 = arith.constant 0 : index
      %32 = vector.load %arg10[%c0_30, %c0_31] : memref<1x4xf32, #tpu.memory_space<vmem>>, vector<1x4xf32>
      %33 = vector.broadcast %32 : vector<1x4xf32> to vector<128x4xf32>
      %34 = arith.addf %31, %33 : vector<128x4xf32>
      %c0_32 = arith.constant 0 : index
      %c0_33 = arith.constant 0 : index
      %35 = vector.load %arg12[%c0_32, %c0_33] : memref<128x4xf32, #tpu.memory_space<vmem>>, vector<128x4xf32>
      tpu.vector_store %arg12[%c0_32, %c0_33], %34 {strides = array<i32>} : memref<128x4xf32, #tpu.memory_space<vmem>>, vector<128x4xf32>,
    } else {
    }
    return
  }
  func.func @transform_0(%arg0: i32, %arg1: i32) -> (i32, i32) {
    %c0_i32 = arith.constant 0 : i32
    return %arg0, %arg1 : i32, i32
  }
  func.func @transform_1(%arg0: i32, %arg1: i32) -> (i32, i32) {
    %c0_i32 = arith.constant 0 : i32
    %c0_i32_0 = arith.constant 0 : i32
    return %arg1, %c0_i32 : i32, i32
  }
  func.func @transform_2(%arg0: i32, %arg1: i32) -> (i32, i32) {
    %c0_i32 = arith.constant 0 : i32
    %c0_i32_0 = arith.constant 0 : i32
    return %arg0, %c0_i32 : i32, i32
  }
  func.func @transform_3(%arg0: i32, %arg1: i32) -> (i32, i32) {
    %c0_i32 = arith.constant 0 : i32
    %c0_i32_0 = arith.constant 0 : i32
    %c0_i32_1 = arith.constant 0 : i32
    return %c0_i32, %c0_i32_0 : i32, i32
  }
  func.func @transform_4(%arg0: i32, %arg1: i32) -> (i32, i32) {
    %c0_i32 = arith.constant 0 : i32
    %c0_i32_0 = arith.constant 0 : i32
    %c0_i32_1 = arith.constant 0 : i32
    return %c0_i32, %c0_i32_0 : i32, i32
  }
  func.func @transform_5(%arg0: i32, %arg1: i32) -> (i32, i32) {
    %c0_i32 = arith.constant 0 : i32
    %c0_i32_0 = arith.constant 0 : i32
    %c0_i32_1 = arith.constant 0 : i32
    return %c0_i32, %c0_i32_0 : i32, i32
  }
  func.func @transform_6(%arg0: i32, %arg1: i32) -> (i32, i32) {
    %c0_i32 = arith.constant 0 : i32
    %c0_i32_0 = arith.constant 0 : i32
    %c0_i32_1 = arith.constant 0 : i32
    return %c0_i32, %c0_i32_0 : i32, i32
  }
  func.func @transform_7(%arg0: i32, %arg1: i32) -> (i32, i32) {
    %c0_i32 = arith.constant 0 : i32
    %c0_i32_0 = arith.constant 0 : i32
    %c0_i32_1 = arith.constant 0 : i32
    return %c0_i32, %c0_i32_0 : i32, i32
  }
  func.func @transform_8(%arg0: i32, %arg1: i32) -> (i32, i32) {
    %c0_i32 = arith.constant 0 : i32
    %c0_i32_0 = arith.constant 0 : i32
    %c0_i32_1 = arith.constant 0 : i32
    return %c0_i32, %c0_i32_0 : i32, i32
  }
  func.func @transform_9(%arg0: i32, %arg1: i32) -> (i32, i32) {
    %c0_i32 = arith.constant 0 : i32
    %c0_i32_0 = arith.constant 0 : i32
    return %arg0, %c0_i32 : i32, i32
  }
  func.func @transform_10(%arg0: i32, %arg1: i32) -> (i32, i32) {
    %c0_i32 = arith.constant 0 : i32
    %c0_i32_0 = arith.constant 0 : i32
    return %arg0, %c0_i32 : i32, i32
  }
}

</mosaic_0001>

<llo_original>
// kernel: tpu_custom_call.1
$region0: #{tpu_custom_call.1}
  #allocation0 [shape = 'u32[]', space=smem, size = 0x4, offset = 0x4, fixed_abs, tag = 'smem constant byte address 0x4 - core index']
  #allocation1 [shape = 'u32[144,128]{1,0:T(1,128)}', space=vmem, size = 0x12000, scoped, tag = 'internal scratch']
  #allocation2 [shape = 'f32[128,4]{1,0:T(8,128)}', space=vmem, size = 0x10000, scoped, tag = 'scratch operand']
  %s0 = inlined_call_operand.vmem [shape: s8[256,256], index: 0, kind: input, shape index: {}]
  %s1 = inlined_call_operand.vmem [shape: bf16[256,4], index: 1, kind: input, shape index: {}]
  %s2 = inlined_call_operand.vmem [shape: bf16[256,4], index: 2, kind: input, shape index: {}]
  %s3 = inlined_call_operand.vmem [shape: f32[4,16], index: 3, kind: input, shape index: {}]
  %s4 = inlined_call_operand.vmem [shape: f32[4,16], index: 4, kind: input, shape index: {}]
  %s5 = inlined_call_operand.vmem [shape: f32[1,16], index: 5, kind: input, shape index: {}]
  %s6 = inlined_call_operand.vmem [shape: f32[16,4], index: 6, kind: input, shape index: {}]
  %s7 = inlined_call_operand.vmem [shape: f32[16,4], index: 7, kind: input, shape index: {}]
  %s8 = inlined_call_operand.vmem [shape: f32[1,4], index: 8, kind: input, shape index: {}]
  %s9 = inlined_call_operand.vmem [shape: bf16[256,4], index: 9, kind: output, shape index: {0}]
  %s10 = inlined_call_operand.vmem [shape: f32[256,4], index: 10, kind: output, shape index: {1}]
  %11 = xla_tuple %s9, %s10
  %s12 = sld [smem:[#allocation0]]
  $region123: #{tpu_custom_call.1} parent=0
    _
  %s14 = ssub.s32 1, %s12
  %s15 = scalar_select 0, %s14, %s12
  $region1: #{tpu_custom_call.1} parent=0
    #allocation3 [shape = 'u8[32768]{0}', space=vmem, size = 0x8000, scoped, tag = 'input window, operand 0']
    loop: start=0, step=1, limit=6
    $region2: #{tpu_custom_call.1} parent=1 // loop_pre_header
      _
    $region3: #{tpu_custom_call.1} parent=1 // loop_header
      %s17 = sphi 0, %s21
      %p18 = scmp.ge.s32.totalorder %s17, 6
      %s24 = sphi 0, %s36
      %s25 = sphi 0, %s32
      %s26 = sphi 0, %s24
      %s27 = sphi 0, %s25
      %s28 = sphi 0, %s26
      %s29 = sphi 0, %s27
      %s41 = sphi 0, %s43
      %s44 = sphi 0, %s41
      %s45 = sphi 0, %s44
      %s61 = sphi 0, %s45
      %s67 = sphi 0, %s69
      %s70 = sphi 0, %s67
      %s71 = sphi 0, %s70
      %s87 = sphi 0, %s71
      %s93 = sphi 0, %s95
      %s96 = sphi 0, %s93
      %s97 = sphi 0, %s96
      %s113 = sphi 0, %s97
      %s117 = sphi 0, %s117
      %s119 = sphi 0, %s117
      %s120 = sphi 0, %s119
      %s134 = sphi 0, %s120
      %s138 = sphi 0, %s138
      %s140 = sphi 0, %s138
      %s141 = sphi 0, %s140
      %s155 = sphi 0, %s141
      %s159 = sphi 0, %s159
      %s161 = sphi 0, %s159
      %s162 = sphi 0, %s161
      %s176 = sphi 0, %s162
      %s180 = sphi 0, %s180
      %s182 = sphi 0, %s180
      %s183 = sphi 0, %s182
      %s197 = sphi 0, %s183
      %s201 = sphi 0, %s201
      %s203 = sphi 0, %s201
      %s204 = sphi 0, %s203
      %s218 = sphi 0, %s204
      %s222 = sphi 0, %s222
      %s224 = sphi 0, %s222
      %s225 = sphi 0, %s224
      %s239 = sphi 0, %s225
      %s245 = sphi 0, %s247
      %s248 = sphi 0, %s245
      %s249 = sphi 0, %s248
      %s265 = sphi 0, %s249
      %s271 = sphi 0, %s273
      %s274 = sphi 0, %s271
      %s275 = sphi 0, %s274
      %s291 = sphi 0, %s275
    $region4: #{tpu_custom_call.1} parent=1 // loop_header_branch
      %20 = sbr.rel (%p18) target = $region8
    $region5: #{tpu_custom_call.1} parent=1 // loop_body
      %s22 = ssub.s32 %s17, 1
      %s23 = ssub.s32 %s17, 2
      %s30 = sadd.s32 1, %s25
      %p31 = scmp.ge.s32.totalorder %s30, 2
      %s32 = scalar_select %p31, 0, %s30
      %s33 = sadd.s32 1, %s24
      %s34 = scalar_select %p31, %s33, %s24
      %p35 = scmp.ge.s32.totalorder %s34, 2
      %s36 = scalar_select %p35, 0, %s34
      %s37 = ssub.s32 %s24, %s36
      %s38 = ssub.s32 %s25, %s32
      %s39 = sor.u32 %s37, %s38
      %p40 = scmp.eq.s32.totalorder %s39, 0
      %s42 = sadd.s32 %s41, 1
      %s43 = scalar_select %p40, %s41, %s42
      %p46 = pneg %p40
      %p47 = scmp.eq.s32.totalorder %s17, 3
      %p48 = por %p46, %p47
      %p49 = scmp.ne.s32.totalorder %s41, %s44
      %p50 = scmp.eq.s32.totalorder %s17, 0
      %p51 = por %p49, %p50
      %p52 = scmp.ne.s32.totalorder %s41, %s44
      %p53 = scmp.eq.s32.totalorder %s22, 3
      %p54 = por %p52, %p53
      %p55 = scmp.ne.s32.totalorder %s44, %s45
      %p56 = scmp.eq.s32.totalorder %s22, 0
      %p57 = por %p55, %p56
      %p58 = scmp.ne.s32.totalorder %s44, %s45
      %p59 = scmp.eq.s32.totalorder %s23, 3
      %p60 = por %p58, %p59
      %p62 = scmp.ne.s32.totalorder %s45, %s61
      %p63 = scmp.eq.s32.totalorder %s23, 0
      %p64 = por %p62, %p63
      %s65 = ssub.s32 %s25, %s32
      %p66 = scmp.eq.s32.totalorder %s65, 0
      %s68 = sadd.s32 %s67, 1
      %s69 = scalar_select %p66, %s67, %s68
      %p72 = pneg %p66
      %p73 = scmp.eq.s32.totalorder %s17, 3
      %p74 = por %p72, %p73
      %p75 = scmp.ne.s32.totalorder %s67, %s70
      %p76 = scmp.eq.s32.totalorder %s17, 0
      %p77 = por %p75, %p76
      %p78 = scmp.ne.s32.totalorder %s67, %s70
      %p79 = scmp.eq.s32.totalorder %s22, 3
      %p80 = por %p78, %p79
      %p81 = scmp.ne.s32.totalorder %s70, %s71
      %p82 = scmp.eq.s32.totalorder %s22, 0
      %p83 = por %p81, %p82
      %p84 = scmp.ne.s32.totalorder %s70, %s71
      %p85 = scmp.eq.s32.totalorder %s23, 3
      %p86 = por %p84, %p85
      %p88 = scmp.ne.s32.totalorder %s71, %s87
      %p89 = scmp.eq.s32.totalorder %s23, 0
      %p90 = por %p88, %p89
      %s91 = ssub.s32 %s24, %s36
      %p92 = scmp.eq.s32.totalorder %s91, 0
      %s94 = sadd.s32 %s93, 1
      %s95 = scalar_select %p92, %s93, %s94
      %p98 = pneg %p92
      %p99 = scmp.eq.s32.totalorder %s17, 3
      %p100 = por %p98, %p99
      %p101 = scmp.ne.s32.totalorder %s93, %s96
      %p102 = scmp.eq.s32.totalorder %s17, 0
      %p103 = por %p101, %p102
      %p104 = scmp.ne.s32.totalorder %s93, %s96
      %p105 = scmp.eq.s32.totalorder %s22, 3
      %p106 = por %p104, %p105
      %p107 = scmp.ne.s32.totalorder %s96, %s97
      %p108 = scmp.eq.s32.totalorder %s22, 0
      %p109 = por %p107, %p108
      %p110 = scmp.ne.s32.totalorder %s96, %s97
      %p111 = scmp.eq.s32.totalorder %s23, 3
      %p112 = por %p110, %p111
      %p114 = scmp.ne.s32.totalorder %s97, %s113
      %p115 = scmp.eq.s32.totalorder %s23, 0
      %p116 = por %p114, %p115
      %s118 = sadd.s32 %s117, 1
      %p121 = scmp.eq.s32.totalorder %s17, 3
      %p122 = scmp.ne.s32.totalorder %s117, %s119
      %p123 = scmp.eq.s32.totalorder %s17, 0
      %p124 = por %p122, %p123
      %p125 = scmp.ne.s32.totalorder %s117, %s119
      %p126 = scmp.eq.s32.totalorder %s22, 3
      %p127 = por %p125, %p126
      %p128 = scmp.ne.s32.totalorder %s119, %s120
      %p129 = scmp.eq.s32.totalorder %s22, 0
      %p130 = por %p128, %p129
      %p131 = scmp.ne.s32.totalorder %s119, %s120
      %p132 = scmp.eq.s32.totalorder %s23, 3
      %p133 = por %p131, %p132
      %p135 = scmp.ne.s32.totalorder %s120, %s134
      %p136 = scmp.eq.s32.totalorder %s23, 0
      %p137 = por %p135, %p136
      %s139 = sadd.s32 %s138, 1
      %p142 = scmp.eq.s32.totalorder %s17, 3
      %p143 = scmp.ne.s32.totalorder %s138, %s140
      %p144 = scmp.eq.s32.totalorder %s17, 0
      %p145 = por %p143, %p144
      %p146 = scmp.ne.s32.totalorder %s138, %s140
      %p147 = scmp.eq.s32.totalorder %s22, 3
      %p148 = por %p146, %p147
      %p149 = scmp.ne.s32.totalorder %s140, %s141
      %p150 = scmp.eq.s32.totalorder %s22, 0
      %p151 = por %p149, %p150
      %p152 = scmp.ne.s32.totalorder %s140, %s141
      %p153 = scmp.eq.s32.totalorder %s23, 3
      %p154 = por %p152, %p153
      %p156 = scmp.ne.s32.totalorder %s141, %s155
      %p157 = scmp.eq.s32.totalorder %s23, 0
      %p158 = por %p156, %p157
      %s160 = sadd.s32 %s159, 1
      %p163 = scmp.eq.s32.totalorder %s17, 3
      %p164 = scmp.ne.s32.totalorder %s159, %s161
      %p165 = scmp.eq.s32.totalorder %s17, 0
      %p166 = por %p164, %p165
      %p167 = scmp.ne.s32.totalorder %s159, %s161
      %p168 = scmp.eq.s32.totalorder %s22, 3
      %p169 = por %p167, %p168
      %p170 = scmp.ne.s32.totalorder %s161, %s162
      %p171 = scmp.eq.s32.totalorder %s22, 0
      %p172 = por %p170, %p171
      %p173 = scmp.ne.s32.totalorder %s161, %s162
      %p174 = scmp.eq.s32.totalorder %s23, 3
      %p175 = por %p173, %p174
      %p177 = scmp.ne.s32.totalorder %s162, %s176
      %p178 = scmp.eq.s32.totalorder %s23, 0
      %p179 = por %p177, %p178
      %s181 = sadd.s32 %s180, 1
      %p184 = scmp.eq.s32.totalorder %s17, 3
      %p185 = scmp.ne.s32.totalorder %s180, %s182
      %p186 = scmp.eq.s32.totalorder %s17, 0
      %p187 = por %p185, %p186
      %p188 = scmp.ne.s32.totalorder %s180, %s182
      %p189 = scmp.eq.s32.totalorder %s22, 3
      %p190 = por %p188, %p189
      %p191 = scmp.ne.s32.totalorder %s182, %s183
      %p192 = scmp.eq.s32.totalorder %s22, 0
      %p193 = por %p191, %p192
      %p194 = scmp.ne.s32.totalorder %s182, %s183
      %p195 = scmp.eq.s32.totalorder %s23, 3
      %p196 = por %p194, %p195
      %p198 = scmp.ne.s32.totalorder %s183, %s197
      %p199 = scmp.eq.s32.totalorder %s23, 0
      %p200 = por %p198, %p199
      %s202 = sadd.s32 %s201, 1
      %p205 = scmp.eq.s32.totalorder %s17, 3
      %p206 = scmp.ne.s32.totalorder %s201, %s203
      %p207 = scmp.eq.s32.totalorder %s17, 0
      %p208 = por %p206, %p207
      %p209 = scmp.ne.s32.totalorder %s201, %s203
      %p210 = scmp.eq.s32.totalorder %s22, 3
      %p211 = por %p209, %p210
      %p212 = scmp.ne.s32.totalorder %s203, %s204
      %p213 = scmp.eq.s32.totalorder %s22, 0
      %p214 = por %p212, %p213
      %p215 = scmp.ne.s32.totalorder %s203, %s204
      %p216 = scmp.eq.s32.totalorder %s23, 3
      %p217 = por %p215, %p216
      %p219 = scmp.ne.s32.totalorder %s204, %s218
      %p220 = scmp.eq.s32.totalorder %s23, 0
      %p221 = por %p219, %p220
      %s223 = sadd.s32 %s222, 1
      %p226 = scmp.eq.s32.totalorder %s17, 3
      %p227 = scmp.ne.s32.totalorder %s222, %s224
      %p228 = scmp.eq.s32.totalorder %s17, 0
      %p229 = por %p227, %p228
      %p230 = scmp.ne.s32.totalorder %s222, %s224
      %p231 = scmp.eq.s32.totalorder %s22, 3
      %p232 = por %p230, %p231
      %p233 = scmp.ne.s32.totalorder %s224, %s225
      %p234 = scmp.eq.s32.totalorder %s22, 0
      %p235 = por %p233, %p234
      %p236 = scmp.ne.s32.totalorder %s224, %s225
      %p237 = scmp.eq.s32.totalorder %s23, 3
      %p238 = por %p236, %p237
      %p240 = scmp.ne.s32.totalorder %s225, %s239
      %p241 = scmp.eq.s32.totalorder %s23, 0
      %p242 = por %p240, %p241
      %s243 = ssub.s32 %s24, %s36
      %p244 = scmp.eq.s32.totalorder %s243, 0
      %s246 = sadd.s32 %s245, 1
      %s247 = scalar_select %p244, %s245, %s246
      %p250 = pneg %p244
      %p251 = scmp.eq.s32.totalorder %s17, 3
      %p252 = por %p250, %p251
      %p253 = scmp.ne.s32.totalorder %s245, %s248
      %p254 = scmp.eq.s32.totalorder %s17, 0
      %p255 = por %p253, %p254
      %p256 = scmp.ne.s32.totalorder %s245, %s248
      %p257 = scmp.eq.s32.totalorder %s22, 3
      %p258 = por %p256, %p257
      %p259 = scmp.ne.s32.totalorder %s248, %s249
      %p260 = scmp.eq.s32.totalorder %s22, 0
      %p261 = por %p259, %p260
      %p262 = scmp.ne.s32.totalorder %s248, %s249
      %p263 = scmp.eq.s32.totalorder %s23, 3
      %p264 = por %p262, %p263
      %p266 = scmp.ne.s32.totalorder %s249, %s265
      %p267 = scmp.eq.s32.totalorder %s23, 0
      %p268 = por %p266, %p267
      %s269 = ssub.s32 %s24, %s36
      %p270 = scmp.eq.s32.totalorder %s269, 0
      %s272 = sadd.s32 %s271, 1
      %s273 = scalar_select %p270, %s271, %s272
      %p276 = pneg %p270
      %p277 = scmp.eq.s32.totalorder %s17, 3
      %p278 = por %p276, %p277
      %p279 = scmp.ne.s32.totalorder %s271, %s274
      %p280 = scmp.eq.s32.totalorder %s17, 0
      %p281 = por %p279, %p280
      %p282 = scmp.ne.s32.totalorder %s271, %s274
      %p283 = scmp.eq.s32.totalorder %s22, 3
      %p284 = por %p282, %p283
      %p285 = scmp.ne.s32.totalorder %s274, %s275
      %p286 = scmp.eq.s32.totalorder %s22, 0
      %p287 = por %p285, %p286
      %p288 = scmp.ne.s32.totalorder %s274, %s275
      %p289 = scmp.eq.s32.totalorder %s23, 3
      %p290 = por %p288, %p289
      %p292 = scmp.ne.s32.totalorder %s275, %s291
      %p293 = scmp.eq.s32.totalorder %s23, 0
      %p294 = por %p292, %p293
      %p295 = scmp.le.s32.totalorder 1, %s17
      %p296 = scmp.lt.s32.totalorder %s17, 5
      %p297 = pnand %p295, %p296
      %p298 = pneg %p297
      // Predicated region
      $region9: #{tpu_custom_call.1} parent=5 // pred_check
        _
      $region10: #{tpu_custom_call.1} parent=5 // pred_check_branch
        %300 = sbr.rel (%p297) target = $region12
      $region11: #{tpu_custom_call.1} parent=5 // pred_region
        %s301 = ssub.s32 %s17, 1
        // Predicated region
        $region13: #{tpu_custom_call.1} parent=11 // pred_check
          %p302 = pneg %p130
        $region14: #{tpu_custom_call.1} parent=11 // pred_check_branch
          %304 = sbr.rel (%p302) target = $region16
        $region15: #{tpu_custom_call.1} parent=11 // pred_region
          _
        $region16: #{tpu_custom_call.1} parent=11 // pred_fallthru
          _
        // Predicated region
        $region17: #{tpu_custom_call.1} parent=11 // pred_check
          %p305 = pneg %p151
        $region18: #{tpu_custom_call.1} parent=11 // pred_check_branch
          %307 = sbr.rel (%p305) target = $region20
        $region19: #{tpu_custom_call.1} parent=11 // pred_region
          _
        $region20: #{tpu_custom_call.1} parent=11 // pred_fallthru
          _
        // Predicated region
        $region21: #{tpu_custom_call.1} parent=11 // pred_check
          %p308 = pneg %p172
        $region22: #{tpu_custom_call.1} parent=11 // pred_check_branch
          %310 = sbr.rel (%p308) target = $region24
        $region23: #{tpu_custom_call.1} parent=11 // pred_region
          _
        $region24: #{tpu_custom_call.1} parent=11 // pred_fallthru
          _
        // Predicated region
        $region25: #{tpu_custom_call.1} parent=11 // pred_check
          %p311 = pneg %p193
        $region26: #{tpu_custom_call.1} parent=11 // pred_check_branch
          %313 = sbr.rel (%p311) target = $region28
        $region27: #{tpu_custom_call.1} parent=11 // pred_region
          _
        $region28: #{tpu_custom_call.1} parent=11 // pred_fallthru
          _
        // Predicated region
        $region29: #{tpu_custom_call.1} parent=11 // pred_check
          %p314 = pneg %p214
        $region30: #{tpu_custom_call.1} parent=11 // pred_check_branch
          %316 = sbr.rel (%p314) target = $region32
        $region31: #{tpu_custom_call.1} parent=11 // pred_region
          _
        $region32: #{tpu_custom_call.1} parent=11 // pred_fallthru
          _
        // Predicated region
        $region33: #{tpu_custom_call.1} parent=11 // pred_check
          %p317 = pneg %p235
        $region34: #{tpu_custom_call.1} parent=11 // pred_check_branch
          %319 = sbr.rel (%p317) target = $region36
        $region35: #{tpu_custom_call.1} parent=11 // pred_region
          _
        $region36: #{tpu_custom_call.1} parent=11 // pred_fallthru
          _
      $region12: #{tpu_custom_call.1} parent=5 // pred_fallthru
        _
      %p320 = scmp.lt.s32.totalorder %s17, 4
      // Predicated region
      $region37: #{tpu_custom_call.1} parent=5 // pred_check
        %p321 = pneg %p320
      $region38: #{tpu_custom_call.1} parent=5 // pred_check_branch
        %323 = sbr.rel (%p321) target = $region40
      $region39: #{tpu_custom_call.1} parent=5 // pred_region
        // Predicated region
        $region41: #{tpu_custom_call.1} parent=39 // pred_check
          %p324 = pneg %p51
        $region42: #{tpu_custom_call.1} parent=39 // pred_check_branch
          %326 = sbr.rel (%p324) target = $region44
        $region43: #{tpu_custom_call.1} parent=39 // pred_region
          %s327 = sand.u32 %s41, 1
          %s328 = sand.u32 %s41, 1
          %s329 = smul.addr %s328, 32
          %s330 = scalar_lea.vmem [#allocation3], %s329
          %s331 = smul.u32 4, %s24
          %s332 = smul.addr %s331, 2
          %s333 = sadd.s32 %s25, %s332
          %s334 = smul.addr %s333, 8
          %s335 = scalar_lea.vmem %s0, %s334
          // Predicated region
          $region45: #{tpu_custom_call.1} parent=43 // pred_check
            _
          $region46: #{tpu_custom_call.1} parent=43 // pred_check_branch
            %337 = sbr.rel (0) target = $region48
          $region47: #{tpu_custom_call.1} parent=43 // pred_region
            // Predicated region
            $region49: #{tpu_custom_call.1} parent=47 // pred_check
              _
            $region50: #{tpu_custom_call.1} parent=47 // pred_check_branch
              %339 = sbr.rel (0) target = $region52
            $region51: #{tpu_custom_call.1} parent=47 // pred_region
              // Predicated region
              $region64: #{tpu_custom_call.1} parent=51 // pred_check
                _
              $region65: #{tpu_custom_call.1} parent=51 // pred_check_branch
                %360 = sbr.rel (0) target = $region67
              $region66: #{tpu_custom_call.1} parent=51 // pred_region
                loop: start=0, step=1, limit=1
                $region68: #{tpu_custom_call.1} parent=66 // loop_pre_header
                  _
                $region69: #{tpu_custom_call.1} parent=66 // loop_header
                  %s362 = sphi 0, %s366
                  %p363 = scmp.ge.s32.totalorder %s362, 1
                  %s367 = sphi %s335, %s335
                  %s368 = sphi %s330, %s330
                $region70: #{tpu_custom_call.1} parent=66 // loop_header_branch
                  %365 = sbr.rel (%p363) target = $region74
                $region71: #{tpu_custom_call.1} parent=66 // loop_body
                  %v369 = vld [vmem:[%s367] sm:$0xff]
                  %370 = vst [vmem:[%s368] sm:$0xff] %v369
                  %v371 = vld [vmem:[%s367 + $0x10] sm:$0xff]
                  %372 = vst [vmem:[%s368 + $0x8] sm:$0xff] %v371
                  %v373 = vld [vmem:[%s367 + $0x20] sm:$0xff]
                  %374 = vst [vmem:[%s368 + $0x10] sm:$0xff] %v373
                  %v375 = vld [vmem:[%s367 + $0x30] sm:$0xff]
                  %376 = vst [vmem:[%s368 + $0x18] sm:$0xff] %v375
                $region72: #{tpu_custom_call.1} parent=66 // loop_footer
                  %s366 = sadd.s32 1, %s362
                $region73: #{tpu_custom_call.1} parent=66 // loop_footer_branch
                  %361 = sbr.rel target = $region69
                $region74: #{tpu_custom_call.1} parent=66 // loop_exit
                  _
              $region67: #{tpu_custom_call.1} parent=51 // pred_fallthru
                _
              // Predicated region
              $region75: #{tpu_custom_call.1} parent=51 // pred_check
                _
              $region76: #{tpu_custom_call.1} parent=51 // pred_check_branch
                %378 = sbr.rel target = $region78
              $region77: #{tpu_custom_call.1} parent=51 // pred_region
                _
              $region78: #{tpu_custom_call.1} parent=51 // pred_fallthru
                _
            $region52: #{tpu_custom_call.1} parent=47 // pred_fallthru
              _
            // Predicated region
            $region53: #{tpu_custom_call.1} parent=47 // pred_check
              _
            $region54: #{tpu_custom_call.1} parent=47 // pred_check_branch
              %341 = sbr.rel target = $region56
            $region55: #{tpu_custom_call.1} parent=47 // pred_region
              loop: start=0, step=1, limit=1
              $region57: #{tpu_custom_call.1} parent=55 // loop_pre_header
                _
              $region58: #{tpu_custom_call.1} parent=55 // loop_header
                %s344 = sphi 0, %s348
                %p345 = scmp.ge.s32.totalorder %s344, 1
                %s349 = sphi %s335, %s335
                %s350 = sphi %s330, %s330
              $region59: #{tpu_custom_call.1} parent=55 // loop_header_branch
                %347 = sbr.rel (%p345) target = $region63
              $region60: #{tpu_custom_call.1} parent=55 // loop_body
                %v351 = vld [vmem:[%s349] sm:$0xff]
                %352 = vst [vmem:[%s350] sm:$0xff] %v351
                %v353 = vld [vmem:[%s349 + $0x10] sm:$0xff]
                %354 = vst [vmem:[%s350 + $0x8] sm:$0xff] %v353
                %v355 = vld [vmem:[%s349 + $0x20] sm:$0xff]
                %356 = vst [vmem:[%s350 + $0x10] sm:$0xff] %v355
                %v357 = vld [vmem:[%s349 + $0x30] sm:$0xff]
                %358 = vst [vmem:[%s350 + $0x18] sm:$0xff] %v357
              $region61: #{tpu_custom_call.1} parent=55 // loop_footer
                %s348 = sadd.s32 1, %s344
              $region62: #{tpu_custom_call.1} parent=55 // loop_footer_branch
                %343 = sbr.rel target = $region58
              $region63: #{tpu_custom_call.1} parent=55 // loop_exit
                _
            $region56: #{tpu_custom_call.1} parent=47 // pred_fallthru
              _
          $region48: #{tpu_custom_call.1} parent=43 // pred_fallthru
            _
          %379 = vnop
        $region44: #{tpu_custom_call.1} parent=39 // pred_fallthru
          _
        // Predicated region
        $region79: #{tpu_custom_call.1} parent=39 // pred_check
          %p380 = pneg %p77
        $region80: #{tpu_custom_call.1} parent=39 // pred_check_branch
          %382 = sbr.rel (%p380) target = $region82
        $region81: #{tpu_custom_call.1} parent=39 // pred_region
          %s383 = smul.u32 16, %s25
          %p384 = scmp.lt.s32.totalorder %s383, 31
          %s385 = scalar_select %p384, %s383, 31
          %s386 = smul.addr %s385, 4
          %s387 = scalar_lea.vmem %s1, %s386
          %s388 = smul.u32 16, %s25
        $region82: #{tpu_custom_call.1} parent=39 // pred_fallthru
          _
        // Predicated region
        $region83: #{tpu_custom_call.1} parent=39 // pred_check
          %p389 = pneg %p103
        $region84: #{tpu_custom_call.1} parent=39 // pred_check_branch
          %391 = sbr.rel (%p389) target = $region86
        $region85: #{tpu_custom_call.1} parent=39 // pred_region
          %s392 = smul.u32 16, %s24
          %p393 = scmp.lt.s32.totalorder %s392, 31
          %s394 = scalar_select %p393, %s392, 31
          %s395 = smul.addr %s394, 4
          %s396 = scalar_lea.vmem %s2, %s395
          %s397 = smul.u32 16, %s24
        $region86: #{tpu_custom_call.1} parent=39 // pred_fallthru
          _
      $region40: #{tpu_custom_call.1} parent=5 // pred_fallthru
        _
      %p398 = scmp.le.s32.totalorder 1, %s17
      %p399 = scmp.lt.s32.totalorder %s17, 5
      %p400 = pnand %p398, %p399
      %p401 = pneg %p400
      // Predicated region
      $region87: #{tpu_custom_call.1} parent=5 // pred_check
        _
      $region88: #{tpu_custom_call.1} parent=5 // pred_check_branch
        %403 = sbr.rel (%p400) target = $region90
      $region89: #{tpu_custom_call.1} parent=5 // pred_region
        %s404 = ssub.s32 %s17, 1
        %s405 = sand.u32 %s44, 1
        %s406 = sand.u32 %s44, 1
        %s407 = smul.addr %s406, 32
        %s408 = scalar_lea.vmem [#allocation3], %s407
        // Predicated region
        $region91: #{tpu_custom_call.1} parent=89 // pred_check
          %p409 = pneg %p57
        $region92: #{tpu_custom_call.1} parent=89 // pred_check_branch
          %411 = sbr.rel (%p409) target = $region94
        $region93: #{tpu_custom_call.1} parent=89 // pred_region
          _
        $region94: #{tpu_custom_call.1} parent=89 // pred_fallthru
          _
        %s412 = sand.u32 %s44, 1
        %s413 = sand.u32 %s44, 1
        %s414 = smul.addr %s413, 32
        %s415 = scalar_lea.vmem [#allocation3], %s414
        %p416 = pneg %p57
        %p417 = pneg %p54
        %s418 = smul.u32 16, %s27
        %p419 = scmp.lt.s32.totalorder %s418, 31
        %s420 = scalar_select %p419, %s418, 31
        %s421 = smul.addr %s420, 4
        %s422 = scalar_lea.vmem %s1, %s421
        %p423 = pneg %p83
        %p424 = pneg %p80
        %s425 = smul.u32 16, %s26
        %p426 = scmp.lt.s32.totalorder %s425, 31
        %s427 = scalar_select %p426, %s425, 31
        %s428 = smul.addr %s427, 4
        %s429 = scalar_lea.vmem %s2, %s428
        %p430 = pneg %p109
        %p431 = pneg %p106
        %p432 = pneg %p130
        %p433 = pneg %p127
        %p434 = pneg %p151
        %p435 = pneg %p148
        %p436 = pneg %p172
        %p437 = pneg %p169
        %p438 = pneg %p193
        %p439 = pneg %p190
        %p440 = pneg %p214
        %p441 = pneg %p211
        %p442 = pneg %p235
        %p443 = pneg %p232
        %p444 = pneg %p261
        %p445 = pneg %p258
        %s446 = smul.u32 16, %s26
        %p447 = scmp.lt.s32.totalorder %s446, 31
        %s448 = scalar_select %p447, %s446, 31
        %s449 = smul.addr %s448, 4
        %s450 = scalar_lea.vmem %s9, %s449
        %p451 = pneg %p287
        %p452 = pneg %p284
        %s453 = smul.u32 16, %s26
        %p454 = scmp.lt.s32.totalorder %s453, 31
        %s455 = scalar_select %p454, %s453, 31
        %s456 = smul.addr %s455, 8
        %s457 = scalar_lea.vmem %s10, %s456
        %s458 = smul.u32 4, %s26
        %s459 = smul.u32 16, %s27
        %p460 = scmp.lt.s32.totalorder %s459, 31
        %s461 = scalar_select %p460, %s459, 31
        %s462 = smul.addr %s461, 4
        %s463 = scalar_lea.vmem %s1, %s462
        %s464 = smul.u32 16, %s27
        %s465 = smul.u32 16, %s26
        %p466 = scmp.lt.s32.totalorder %s465, 31
        %s467 = scalar_select %p466, %s465, 31
        %s468 = smul.addr %s467, 4
        %s469 = scalar_lea.vmem %s2, %s468
        %s470 = smul.u32 16, %s26
        %s471 = smul.u32 16, %s26
        %p472 = scmp.lt.s32.totalorder %s471, 31
        %s473 = scalar_select %p472, %s471, 31
        %s474 = smul.addr %s473, 4
        %s475 = scalar_lea.vmem %s9, %s474
        %s476 = smul.u32 16, %s26
        %s477 = smul.u32 16, %s26
        %p478 = scmp.lt.s32.totalorder %s477, 31
        %s479 = scalar_select %p478, %s477, 31
        %s480 = smul.addr %s479, 8
        %s481 = scalar_lea.vmem %s10, %s480
        %s482 = smul.u32 16, %s26
        %p484 = scmp.eq.s32.totalorder %s27, 0
        // Predicated region
        $region95: #{tpu_custom_call.1} parent=89 // pred_check
          %p485 = pneg %p484
        $region96: #{tpu_custom_call.1} parent=89 // pred_check_branch
          %487 = sbr.rel (%p485) target = $region98
        $region97: #{tpu_custom_call.1} parent=89 // pred_region
          %vm488 = vcmask 31744
          %489 = vst.msk [vmem:[#allocation2] sm:$0xff] %vm488, 0.0
          %490 = vst.msk [vmem:[#allocation2 + $0x8] sm:$0xff] %vm488, 0.0
          %491 = vst.msk [vmem:[#allocation2 + $0x10] sm:$0xff] %vm488, 0.0
          %492 = vst.msk [vmem:[#allocation2 + $0x18] sm:$0xff] %vm488, 0.0
          %493 = vst.msk [vmem:[#allocation2 + $0x20] sm:$0xff] %vm488, 0.0
          %494 = vst.msk [vmem:[#allocation2 + $0x28] sm:$0xff] %vm488, 0.0
          %495 = vst.msk [vmem:[#allocation2 + $0x30] sm:$0xff] %vm488, 0.0
          %496 = vst.msk [vmem:[#allocation2 + $0x38] sm:$0xff] %vm488, 0.0
          %497 = vst.msk [vmem:[#allocation2 + $0x40] sm:$0xff] %vm488, 0.0
          %498 = vst.msk [vmem:[#allocation2 + $0x48] sm:$0xff] %vm488, 0.0
          %499 = vst.msk [vmem:[#allocation2 + $0x50] sm:$0xff] %vm488, 0.0
          %500 = vst.msk [vmem:[#allocation2 + $0x58] sm:$0xff] %vm488, 0.0
          %501 = vst.msk [vmem:[#allocation2 + $0x60] sm:$0xff] %vm488, 0.0
          %502 = vst.msk [vmem:[#allocation2 + $0x68] sm:$0xff] %vm488, 0.0
          %503 = vst.msk [vmem:[#allocation2 + $0x70] sm:$0xff] %vm488, 0.0
          %504 = vst.msk [vmem:[#allocation2 + $0x78] sm:$0xff] %vm488, 0.0
        $region98: #{tpu_custom_call.1} parent=89 // pred_fallthru
          _
        %v505 = vld [vmem:[%s408] sm:$0xff]
        %v506 = vld [vmem:[%s408 + $0x8] sm:$0xff]
        %v507 = vld [vmem:[%s408 + $0x10] sm:$0xff]
        %v508 = vld [vmem:[%s408 + $0x18] sm:$0xff]
        %v509 = vunpack.c.l.s8.bf16 %v505
        %v510 = vunpack.c.h.s8.bf16 %v505
        %v511 = vunpack.c.l.s8.bf16 %v506
        %v512 = vunpack.c.h.s8.bf16 %v506
        %v513 = vunpack.c.l.s8.bf16 %v507
        %v514 = vunpack.c.h.s8.bf16 %v507
        %v515 = vunpack.c.l.s8.bf16 %v508
        %v516 = vunpack.c.h.s8.bf16 %v508
        %v517 = vld [vmem:[#allocation2] sm:$0xff]
        %v518 = vld [vmem:[#allocation2 + $0x8] sm:$0xff]
        %v519 = vld [vmem:[#allocation2 + $0x10] sm:$0xff]
        %v520 = vld [vmem:[#allocation2 + $0x18] sm:$0xff]
        %v521 = vld [vmem:[#allocation2 + $0x20] sm:$0xff]
        %v522 = vld [vmem:[#allocation2 + $0x28] sm:$0xff]
        %v523 = vld [vmem:[#allocation2 + $0x30] sm:$0xff]
        %v524 = vld [vmem:[#allocation2 + $0x38] sm:$0xff]
        %v525 = vld [vmem:[#allocation2 + $0x40] sm:$0xff]
        %v526 = vld [vmem:[#allocation2 + $0x48] sm:$0xff]
        %v527 = vld [vmem:[#allocation2 + $0x50] sm:$0xff]
        %v528 = vld [vmem:[#allocation2 + $0x58] sm:$0xff]
        %v529 = vld [vmem:[#allocation2 + $0x60] sm:$0xff]
        %v530 = vld [vmem:[#allocation2 + $0x68] sm:$0xff]
        %v531 = vld [vmem:[#allocation2 + $0x70] sm:$0xff]
        %v532 = vld [vmem:[#allocation2 + $0x78] sm:$0xff]
        %v533 = vld [vmem:[%s463] sm:$0xf]
        %v534 = vld [vmem:[%s463 + $0x4] sm:$0xf]
        %v535 = vld [vmem:[%s463 + $0x8] sm:$0xf]
        %v536 = vld [vmem:[%s463 + $0xc] sm:$0xf]
        %v537 = vld [vmem:[%s463 + $0x10] sm:$0xf]
        %v538 = vld [vmem:[%s463 + $0x14] sm:$0xf]
        %v539 = vld [vmem:[%s463 + $0x18] sm:$0xf]
        %v540 = vld [vmem:[%s463 + $0x1c] sm:$0xf]
        %v541 = vld [vmem:[%s463 + $0x20] sm:$0xf]
        %v542 = vld [vmem:[%s463 + $0x24] sm:$0xf]
        %v543 = vld [vmem:[%s463 + $0x28] sm:$0xf]
        %v544 = vld [vmem:[%s463 + $0x2c] sm:$0xf]
        %v545 = vld [vmem:[%s463 + $0x30] sm:$0xf]
        %v546 = vld [vmem:[%s463 + $0x34] sm:$0xf]
        %v547 = vld [vmem:[%s463 + $0x38] sm:$0xf]
        %v548 = vld [vmem:[%s463 + $0x3c] sm:$0xf]
        %v565 = vunpack.c.l.b16 %v533
        %v566 = vunpack.c.l.b16 %v534
        %v567 = vunpack.c.l.b16 %v535
        %v568 = vunpack.c.l.b16 %v536
        %v569 = vunpack.c.l.b16 %v537
        %v570 = vunpack.c.l.b16 %v538
        %v571 = vunpack.c.l.b16 %v539
        %v572 = vunpack.c.l.b16 %v540
        %v573 = vunpack.c.l.b16 %v541
        %v574 = vunpack.c.l.b16 %v542
        %v575 = vunpack.c.l.b16 %v543
        %v576 = vunpack.c.l.b16 %v544
        %v577 = vunpack.c.l.b16 %v545
        %v578 = vunpack.c.l.b16 %v546
        %v579 = vunpack.c.l.b16 %v547
        %v580 = vunpack.c.l.b16 %v548
        %v581 = vpack.c.b16 %v566, %v565
        %v582 = vpack.c.b16 %v568, %v567
        %v583 = vpack.c.b16 %v570, %v569
        %v584 = vpack.c.b16 %v572, %v571
        %v585 = vpack.c.b16 %v574, %v573
        %v586 = vpack.c.b16 %v576, %v575
        %v587 = vpack.c.b16 %v578, %v577
        %v588 = vpack.c.b16 %v580, %v579
        %597 = vmatprep.subr.bf16.mxu0 0
        %598 = vmatpush1.bf16.msra.mxu0 %v581
        %599 = vmatprep.subr.bf16.mxu0 0
        %600 = vmatpush1.bf16.msra.mxu0 %v582
        %601 = vmatprep.subr.bf16.mxu0 0
        %602 = vmatpush1.bf16.msra.mxu0 %v583
        %603 = vmatprep.subr.bf16.mxu0 0
        %604 = vmatpush1.bf16.msra.mxu0 %v584
        %605 = vmatprep.subr.bf16.mxu0 0
        %606 = vmatpush1.bf16.msra.mxu0 %v585
        %607 = vmatprep.subr.bf16.mxu0 0
        %608 = vmatpush1.bf16.msra.mxu0 %v586
        %609 = vmatprep.subr.bf16.mxu0 0
        %610 = vmatpush1.bf16.msra.mxu0 %v587
        %611 = vmatprep.subr.bf16.mxu0 0
        %612 = vmatpush1.bf16.msra.mxu0 %v588
        %613 = vmatprep.subr.bf16.mxu0 0
        %614 = vmatpush1.bf16.msra.mxu0 0
        %615 = vmatprep.subr.bf16.mxu0 0
        %616 = vmatpush1.bf16.msra.mxu0 0
        %617 = vmatprep.subr.bf16.mxu0 0
        %618 = vmatpush1.bf16.msra.mxu0 0
        %619 = vmatprep.subr.bf16.mxu0 0
        %620 = vmatpush1.bf16.msra.mxu0 0
        %621 = vmatprep.subr.bf16.mxu0 0
        %622 = vmatpush1.bf16.msra.mxu0 0
        %623 = vmatprep.subr.bf16.mxu0 0
        %624 = vmatpush1.bf16.msra.mxu0 0
        %625 = vmatprep.subr.bf16.mxu0 0
        %626 = vmatpush1.bf16.msra.mxu0 0
        %627 = vmatprep.subr.bf16.mxu0 0
        %628 = vmatpush1.bf16.msra.mxu0 0
        %629 = vmatprep.mubr.bf16.mxu0 0
        %630 = vmatmul.mubr.bf16.gmra.mrb[0].mxu0 %v509
        %v631 = vpop.f32.mrb[0].mxu0
        %v632 = vadd.f32 0.0, %v631
        %v633 = vpop.f32.mrb[0].mxu0
        %v634 = vpop.f32.mrb[0].mxu0
        %v635 = vadd.f32 0.0, %v634
        %v636 = vpop.f32.mrb[0].mxu0
        %637 = vmatprep.mubr.bf16.mxu0 0
        %638 = vmatmul.mubr.bf16.gmra.mrb[0].mxu0 %v510
        %v639 = vpop.f32.mrb[0].mxu0
        %v640 = vadd.f32 0.0, %v639
        %v641 = vpop.f32.mrb[0].mxu0
        %v642 = vpop.f32.mrb[0].mxu0
        %v643 = vadd.f32 0.0, %v642
        %v644 = vpop.f32.mrb[0].mxu0
        %645 = vmatprep.mubr.bf16.mxu0 0
        %646 = vmatmul.mubr.bf16.gmra.mrb[0].mxu0 %v511
        %v647 = vpop.f32.mrb[0].mxu0
        %v648 = vadd.f32 0.0, %v647
        %v649 = vpop.f32.mrb[0].mxu0
        %v650 = vpop.f32.mrb[0].mxu0
        %v651 = vadd.f32 0.0, %v650
        %v652 = vpop.f32.mrb[0].mxu0
        %653 = vmatprep.mubr.bf16.mxu0 0
        %654 = vmatmul.mubr.bf16.gmra.mrb[0].mxu0 %v512
        %v655 = vpop.f32.mrb[0].mxu0
        %v656 = vadd.f32 0.0, %v655
        %v657 = vpop.f32.mrb[0].mxu0
        %v658 = vpop.f32.mrb[0].mxu0
        %v659 = vadd.f32 0.0, %v658
        %v660 = vpop.f32.mrb[0].mxu0
        %661 = vmatprep.mubr.bf16.mxu0 0
        %662 = vmatmul.mubr.bf16.gmra.mrb[0].mxu0 %v513
        %v663 = vpop.f32.mrb[0].mxu0
        %v664 = vadd.f32 0.0, %v663
        %v665 = vpop.f32.mrb[0].mxu0
        %v666 = vpop.f32.mrb[0].mxu0
        %v667 = vadd.f32 0.0, %v666
        %v668 = vpop.f32.mrb[0].mxu0
        %669 = vmatprep.mubr.bf16.mxu0 0
        %670 = vmatmul.mubr.bf16.gmra.mrb[0].mxu0 %v514
        %v671 = vpop.f32.mrb[0].mxu0
        %v672 = vadd.f32 0.0, %v671
        %v673 = vpop.f32.mrb[0].mxu0
        %v674 = vpop.f32.mrb[0].mxu0
        %v675 = vadd.f32 0.0, %v674
        %v676 = vpop.f32.mrb[0].mxu0
        %677 = vmatprep.mubr.bf16.mxu0 0
        %678 = vmatmul.mubr.bf16.gmra.mrb[0].mxu0 %v515
        %v679 = vpop.f32.mrb[0].mxu0
        %v680 = vadd.f32 0.0, %v679
        %v681 = vpop.f32.mrb[0].mxu0
        %v682 = vpop.f32.mrb[0].mxu0
        %v683 = vadd.f32 0.0, %v682
        %v684 = vpop.f32.mrb[0].mxu0
        %685 = vmatprep.mubr.bf16.mxu0 0
        %686 = vmatmul.mubr.bf16.gmra.mrb[0].mxu0 %v516
        %v687 = vpop.f32.mrb[0].mxu0
        %v688 = vadd.f32 0.0, %v687
        %v689 = vpop.f32.mrb[0].mxu0
        %v690 = vpop.f32.mrb[0].mxu0
        %v691 = vadd.f32 0.0, %v690
        %v692 = vpop.f32.mrb[0].mxu0
        %693 = vdwg.mxu0
        %v694 = vadd.f32 %v517, %v632
        %v695 = vadd.f32 %v518, %v635
        %v696 = vadd.f32 %v519, %v640
        %v697 = vadd.f32 %v520, %v643
        %v698 = vadd.f32 %v521, %v648
        %v699 = vadd.f32 %v522, %v651
        %v700 = vadd.f32 %v523, %v656
        %v701 = vadd.f32 %v524, %v659
        %v702 = vadd.f32 %v525, %v664
        %v703 = vadd.f32 %v526, %v667
        %v704 = vadd.f32 %v527, %v672
        %v705 = vadd.f32 %v528, %v675
        %v706 = vadd.f32 %v529, %v680
        %v707 = vadd.f32 %v530, %v683
        %v708 = vadd.f32 %v531, %v688
        %v709 = vadd.f32 %v532, %v691
        %vm710 = vcmask 31744
        %711 = vst.msk [vmem:[#allocation2] sm:$0xff] %vm710, %v694
        %712 = vst.msk [vmem:[#allocation2 + $0x8] sm:$0xff] %vm710, %v695
        %713 = vst.msk [vmem:[#allocation2 + $0x10] sm:$0xff] %vm710, %v696
        %714 = vst.msk [vmem:[#allocation2 + $0x18] sm:$0xff] %vm710, %v697
        %715 = vst.msk [vmem:[#allocation2 + $0x20] sm:$0xff] %vm710, %v698
        %716 = vst.msk [vmem:[#allocation2 + $0x28] sm:$0xff] %vm710, %v699
        %717 = vst.msk [vmem:[#allocation2 + $0x30] sm:$0xff] %vm710, %v700
        %718 = vst.msk [vmem:[#allocation2 + $0x38] sm:$0xff] %vm710, %v701
        %719 = vst.msk [vmem:[#allocation2 + $0x40] sm:$0xff] %vm710, %v702
        %720 = vst.msk [vmem:[#allocation2 + $0x48] sm:$0xff] %vm710, %v703
        %721 = vst.msk [vmem:[#allocation2 + $0x50] sm:$0xff] %vm710, %v704
        %722 = vst.msk [vmem:[#allocation2 + $0x58] sm:$0xff] %vm710, %v705
        %723 = vst.msk [vmem:[#allocation2 + $0x60] sm:$0xff] %vm710, %v706
        %724 = vst.msk [vmem:[#allocation2 + $0x68] sm:$0xff] %vm710, %v707
        %725 = vst.msk [vmem:[#allocation2 + $0x70] sm:$0xff] %vm710, %v708
        %726 = vst.msk [vmem:[#allocation2 + $0x78] sm:$0xff] %vm710, %v709
        %p727 = scmp.eq.s32.totalorder %s27, 1
        // Predicated region
        $region99: #{tpu_custom_call.1} parent=89 // pred_check
          %p728 = pneg %p727
        $region100: #{tpu_custom_call.1} parent=89 // pred_check_branch
          %730 = sbr.rel (%p728) target = $region102
        $region101: #{tpu_custom_call.1} parent=89 // pred_region
          %v731 = vld [vmem:[#allocation2] sm:$0xff]
          %v732 = vld [vmem:[#allocation2 + $0x8] sm:$0xff]
          %v733 = vld [vmem:[#allocation2 + $0x10] sm:$0xff]
          %v734 = vld [vmem:[#allocation2 + $0x18] sm:$0xff]
          %v735 = vld [vmem:[#allocation2 + $0x20] sm:$0xff]
          %v736 = vld [vmem:[#allocation2 + $0x28] sm:$0xff]
          %v737 = vld [vmem:[#allocation2 + $0x30] sm:$0xff]
          %v738 = vld [vmem:[#allocation2 + $0x38] sm:$0xff]
          %v739 = vld [vmem:[#allocation2 + $0x40] sm:$0xff]
          %v740 = vld [vmem:[#allocation2 + $0x48] sm:$0xff]
          %v741 = vld [vmem:[#allocation2 + $0x50] sm:$0xff]
          %v742 = vld [vmem:[#allocation2 + $0x58] sm:$0xff]
          %v743 = vld [vmem:[#allocation2 + $0x60] sm:$0xff]
          %v744 = vld [vmem:[#allocation2 + $0x68] sm:$0xff]
          %v745 = vld [vmem:[#allocation2 + $0x70] sm:$0xff]
          %v746 = vld [vmem:[#allocation2 + $0x78] sm:$0xff]
          %v747 = vld [vmem:[%s469] sm:$0xf]
          %v748 = vld [vmem:[%s469 + $0x4] sm:$0xf]
          %v749 = vld [vmem:[%s469 + $0x8] sm:$0xf]
          %v750 = vld [vmem:[%s469 + $0xc] sm:$0xf]
          %v751 = vld [vmem:[%s469 + $0x10] sm:$0xf]
          %v752 = vld [vmem:[%s469 + $0x14] sm:$0xf]
          %v753 = vld [vmem:[%s469 + $0x18] sm:$0xf]
          %v754 = vld [vmem:[%s469 + $0x1c] sm:$0xf]
          %v755 = vld [vmem:[%s469 + $0x20] sm:$0xf]
          %v756 = vld [vmem:[%s469 + $0x24] sm:$0xf]
          %v757 = vld [vmem:[%s469 + $0x28] sm:$0xf]
          %v758 = vld [vmem:[%s469 + $0x2c] sm:$0xf]
          %v759 = vld [vmem:[%s469 + $0x30] sm:$0xf]
          %v760 = vld [vmem:[%s469 + $0x34] sm:$0xf]
          %v761 = vld [vmem:[%s469 + $0x38] sm:$0xf]
          %v762 = vld [vmem:[%s469 + $0x3c] sm:$0xf]
          %v763 = vunpack.c.l.bf16 %v747
          %v764 = vunpack.c.l.bf16 %v748
          %v765 = vunpack.c.l.bf16 %v749
          %v766 = vunpack.c.l.bf16 %v750
          %v767 = vunpack.c.l.bf16 %v751
          %v768 = vunpack.c.l.bf16 %v752
          %v769 = vunpack.c.l.bf16 %v753
          %v770 = vunpack.c.l.bf16 %v754
          %v771 = vunpack.c.l.bf16 %v755
          %v772 = vunpack.c.l.bf16 %v756
          %v773 = vunpack.c.l.bf16 %v757
          %v774 = vunpack.c.l.bf16 %v758
          %v775 = vunpack.c.l.bf16 %v759
          %v776 = vunpack.c.l.bf16 %v760
          %v777 = vunpack.c.l.bf16 %v761
          %v778 = vunpack.c.l.bf16 %v762
          %v779 = vld [vmem:[%s3] sm:$0xf]
          %v780 = vld [vmem:[%s4] sm:$0xf]
          %v782 = vsel %vm710, %v763, 0
          %v785 = vsel %vm710, %v764, 0
          %v788 = vsel %vm710, %v765, 0
          %v791 = vsel %vm710, %v766, 0
          %v794 = vsel %vm710, %v767, 0
          %v797 = vsel %vm710, %v768, 0
          %v800 = vsel %vm710, %v769, 0
          %v803 = vsel %vm710, %v770, 0
          %v806 = vsel %vm710, %v771, 0
          %v809 = vsel %vm710, %v772, 0
          %v812 = vsel %vm710, %v773, 0
          %v815 = vsel %vm710, %v774, 0
          %v818 = vsel %vm710, %v775, 0
          %v821 = vsel %vm710, %v776, 0
          %v824 = vsel %vm710, %v777, 0
          %v827 = vsel %vm710, %v778, 0
          %vm829 = vcmask 1043456
          %v831 = vsel %vm829, %v780, 0
          %833 = vmatprep.subr.mxu0 0.0
          %834 = vmatpush1.msra.mxu0 %v831
          %835 = vmatprep.subr.mxu0 0.0
          %836 = vmatpush1.msra.mxu0 0.0
          %837 = vmatprep.subr.mxu0 0.0
          %838 = vmatpush1.msra.mxu0 0.0
          %839 = vmatprep.subr.mxu0 0.0
          %840 = vmatpush1.msra.mxu0 0.0
          %841 = vmatprep.subr.mxu0 0.0
          %842 = vmatpush1.msra.mxu0 0.0
          %843 = vmatprep.subr.mxu0 0.0
          %844 = vmatpush1.msra.mxu0 0.0
          %845 = vmatprep.subr.mxu0 0.0
          %846 = vmatpush1.msra.mxu0 0.0
          %847 = vmatprep.subr.mxu0 0.0
          %848 = vmatpush1.msra.mxu0 0.0
          %849 = vmatprep.subr.mxu0 0.0
          %850 = vmatpush1.msra.mxu0 0.0
          %851 = vmatprep.subr.mxu0 0.0
          %852 = vmatpush1.msra.mxu0 0.0
          %853 = vmatprep.subr.mxu0 0.0
          %854 = vmatpush1.msra.mxu0 0.0
          %855 = vmatprep.subr.mxu0 0.0
          %856 = vmatpush1.msra.mxu0 0.0
          %857 = vmatprep.subr.mxu0 0.0
          %858 = vmatpush1.msra.mxu0 0.0
          %859 = vmatprep.subr.mxu0 0.0
          %860 = vmatpush1.msra.mxu0 0.0
          %861 = vmatprep.subr.mxu0 0.0
          %862 = vmatpush1.msra.mxu0 0.0
          %863 = vmatprep.subr.mxu0 0.0
          %864 = vmatpush1.msra.mxu0 0.0
          %865 = vmatprep.subr.mxu0 0.0
          %866 = vmatpush1.msra.mxu0 0.0
          %867 = vmatprep.subr.mxu0 0.0
          %868 = vmatpush1.msra.mxu0 0.0
          %869 = vmatprep.subr.mxu0 0.0
          %870 = vmatpush1.msra.mxu0 0.0
          %871 = vmatprep.subr.mxu0 0.0
          %872 = vmatpush1.msra.mxu0 0.0
          %873 = vmatprep.subr.mxu0 0.0
          %874 = vmatpush1.msra.mxu0 0.0
          %875 = vmatprep.subr.mxu0 0.0
          %876 = vmatpush1.msra.mxu0 0.0
          %877 = vmatprep.subr.mxu0 0.0
          %878 = vmatpush1.msra.mxu0 0.0
          %879 = vmatprep.subr.mxu0 0.0
          %880 = vmatpush1.msra.mxu0 0.0
          %881 = vmatprep.subr.mxu0 0.0
          %882 = vmatpush1.msra.mxu0 0.0
          %883 = vmatprep.subr.mxu0 0.0
          %884 = vmatpush1.msra.mxu0 0.0
          %885 = vmatprep.subr.mxu0 0.0
          %886 = vmatpush1.msra.mxu0 0.0
          %887 = vmatprep.subr.mxu0 0.0
          %888 = vmatpush1.msra.mxu0 0.0
          %889 = vmatprep.subr.mxu0 0.0
          %890 = vmatpush1.msra.mxu0 0.0
          %891 = vmatprep.subr.mxu0 0.0
          %892 = vmatpush1.msra.mxu0 0.0
          %893 = vmatprep.subr.mxu0 0.0
          %894 = vmatpush1.msra.mxu0 0.0
          %895 = vmatprep.subr.mxu0 0.0
          %896 = vmatpush1.msra.mxu0 0.0
          %897 = vmatprep.mubr.f32.mxu0 0.0
          %898 = vmatmul.mubr.f32.gmra.mrb[0].mxu0 %v782
          %v899 = vpop.f32.mrb[0].mxu0
          %v900 = vadd.f32 0.0, %v899
          %v901 = vpop.f32.mrb[0].mxu0
          %902 = vmatprep.mubr.f32.mxu0 0.0
          %903 = vmatmul.mubr.f32.gmra.mrb[0].mxu0 %v785
          %v904 = vpop.f32.mrb[0].mxu0
          %v905 = vadd.f32 0.0, %v904
          %v906 = vpop.f32.mrb[0].mxu0
          %907 = vmatprep.mubr.f32.mxu0 0.0
          %908 = vmatmul.mubr.f32.gmra.mrb[0].mxu0 %v788
          %v909 = vpop.f32.mrb[0].mxu0
          %v910 = vadd.f32 0.0, %v909
          %v911 = vpop.f32.mrb[0].mxu0
          %912 = vmatprep.mubr.f32.mxu0 0.0
          %913 = vmatmul.mubr.f32.gmra.mrb[0].mxu0 %v791
          %v914 = vpop.f32.mrb[0].mxu0
          %v915 = vadd.f32 0.0, %v914
          %v916 = vpop.f32.mrb[0].mxu0
          %917 = vmatprep.mubr.f32.mxu0 0.0
          %918 = vmatmul.mubr.f32.gmra.mrb[0].mxu0 %v794
          %v919 = vpop.f32.mrb[0].mxu0
          %v920 = vadd.f32 0.0, %v919
          %v921 = vpop.f32.mrb[0].mxu0
          %922 = vmatprep.mubr.f32.mxu0 0.0
          %923 = vmatmul.mubr.f32.gmra.mrb[0].mxu0 %v797
          %v924 = vpop.f32.mrb[0].mxu0
          %v925 = vadd.f32 0.0, %v924
          %v926 = vpop.f32.mrb[0].mxu0
          %927 = vmatprep.mubr.f32.mxu0 0.0
          %928 = vmatmul.mubr.f32.gmra.mrb[0].mxu0 %v800
          %v929 = vpop.f32.mrb[0].mxu0
          %v930 = vadd.f32 0.0, %v929
          %v931 = vpop.f32.mrb[0].mxu0
          %932 = vmatprep.mubr.f32.mxu0 0.0
          %933 = vmatmul.mubr.f32.gmra.mrb[0].mxu0 %v803
          %v934 = vpop.f32.mrb[0].mxu0
          %v935 = vadd.f32 0.0, %v934
          %v936 = vpop.f32.mrb[0].mxu0
          %937 = vmatprep.mubr.f32.mxu0 0.0
          %938 = vmatmul.mubr.f32.gmra.mrb[0].mxu0 %v806
          %v939 = vpop.f32.mrb[0].mxu0
          %v940 = vadd.f32 0.0, %v939
          %v941 = vpop.f32.mrb[0].mxu0
          %942 = vmatprep.mubr.f32.mxu0 0.0
          %943 = vmatmul.mubr.f32.gmra.mrb[0].mxu0 %v809
          %v944 = vpop.f32.mrb[0].mxu0
          %v945 = vadd.f32 0.0, %v944
          %v946 = vpop.f32.mrb[0].mxu0
          %947 = vmatprep.mubr.f32.mxu0 0.0
          %948 = vmatmul.mubr.f32.gmra.mrb[0].mxu0 %v812
          %v949 = vpop.f32.mrb[0].mxu0
          %v950 = vadd.f32 0.0, %v949
          %v951 = vpop.f32.mrb[0].mxu0
          %952 = vmatprep.mubr.f32.mxu0 0.0
          %953 = vmatmul.mubr.f32.gmra.mrb[0].mxu0 %v815
          %v954 = vpop.f32.mrb[0].mxu0
          %v955 = vadd.f32 0.0, %v954
          %v956 = vpop.f32.mrb[0].mxu0
          %957 = vmatprep.mubr.f32.mxu0 0.0
          %958 = vmatmul.mubr.f32.gmra.mrb[0].mxu0 %v818
          %v959 = vpop.f32.mrb[0].mxu0
          %v960 = vadd.f32 0.0, %v959
          %v961 = vpop.f32.mrb[0].mxu0
          %962 = vmatprep.mubr.f32.mxu0 0.0
          %963 = vmatmul.mubr.f32.gmra.mrb[0].mxu0 %v821
          %v964 = vpop.f32.mrb[0].mxu0
          %v965 = vadd.f32 0.0, %v964
          %v966 = vpop.f32.mrb[0].mxu0
          %967 = vmatprep.mubr.f32.mxu0 0.0
          %968 = vmatmul.mubr.f32.gmra.mrb[0].mxu0 %v824
          %v969 = vpop.f32.mrb[0].mxu0
          %v970 = vadd.f32 0.0, %v969
          %v971 = vpop.f32.mrb[0].mxu0
          %972 = vmatprep.mubr.f32.mxu0 0.0
          %973 = vmatmul.mubr.f32.gmra.mrb[0].mxu0 %v827
          %v974 = vpop.f32.mrb[0].mxu0
          %v975 = vadd.f32 0.0, %v974
          %v976 = vpop.f32.mrb[0].mxu0
          %977 = vdwg.mxu0
          %v979 = vsel %vm710, %v731, 0
          %v982 = vsel %vm710, %v732, 0
          %v985 = vsel %vm710, %v733, 0
          %v988 = vsel %vm710, %v734, 0
          %v991 = vsel %vm710, %v735, 0
          %v994 = vsel %vm710, %v736, 0
          %v997 = vsel %vm710, %v737, 0
          %v1000 = vsel %vm710, %v738, 0
          %v1003 = vsel %vm710, %v739, 0
          %v1006 = vsel %vm710, %v740, 0
          %v1009 = vsel %vm710, %v741, 0
          %v1012 = vsel %vm710, %v742, 0
          %v1015 = vsel %vm710, %v743, 0
          %v1018 = vsel %vm710, %v744, 0
          %v1021 = vsel %vm710, %v745, 0
          %v1024 = vsel %vm710, %v746, 0
          %v1027 = vsel %vm829, %v779, 0
          %1029 = vmatprep.subr.mxu0 0.0
          %1030 = vmatpush1.msra.mxu0 %v1027
          %1031 = vmatprep.subr.mxu0 0.0
          %1032 = vmatpush1.msra.mxu0 0.0
          %1033 = vmatprep.subr.mxu0 0.0
          %1034 = vmatpush1.msra.mxu0 0.0
          %1035 = vmatprep.subr.mxu0 0.0
          %1036 = vmatpush1.msra.mxu0 0.0
          %1037 = vmatprep.subr.mxu0 0.0
          %1038 = vmatpush1.msra.mxu0 0.0
          %1039 = vmatprep.subr.mxu0 0.0
          %1040 = vmatpush1.msra.mxu0 0.0
          %1041 = vmatprep.subr.mxu0 0.0
          %1042 = vmatpush1.msra.mxu0 0.0
          %1043 = vmatprep.subr.mxu0 0.0
          %1044 = vmatpush1.msra.mxu0 0.0
          %1045 = vmatprep.subr.mxu0 0.0
          %1046 = vmatpush1.msra.mxu0 0.0
          %1047 = vmatprep.subr.mxu0 0.0
          %1048 = vmatpush1.msra.mxu0 0.0
          %1049 = vmatprep.subr.mxu0 0.0
          %1050 = vmatpush1.msra.mxu0 0.0
          %1051 = vmatprep.subr.mxu0 0.0
          %1052 = vmatpush1.msra.mxu0 0.0
          %1053 = vmatprep.subr.mxu0 0.0
          %1054 = vmatpush1.msra.mxu0 0.0
          %1055 = vmatprep.subr.mxu0 0.0
          %1056 = vmatpush1.msra.mxu0 0.0
          %1057 = vmatprep.subr.mxu0 0.0
          %1058 = vmatpush1.msra.mxu0 0.0
          %1059 = vmatprep.subr.mxu0 0.0
          %1060 = vmatpush1.msra.mxu0 0.0
          %1061 = vmatprep.subr.mxu0 0.0
          %1062 = vmatpush1.msra.mxu0 0.0
          %1063 = vmatprep.subr.mxu0 0.0
          %1064 = vmatpush1.msra.mxu0 0.0
          %1065 = vmatprep.subr.mxu0 0.0
          %1066 = vmatpush1.msra.mxu0 0.0
          %1067 = vmatprep.subr.mxu0 0.0
          %1068 = vmatpush1.msra.mxu0 0.0
          %1069 = vmatprep.subr.mxu0 0.0
          %1070 = vmatpush1.msra.mxu0 0.0
          %1071 = vmatprep.subr.mxu0 0.0
          %1072 = vmatpush1.msra.mxu0 0.0
          %1073 = vmatprep.subr.mxu0 0.0
          %1074 = vmatpush1.msra.mxu0 0.0
          %1075 = vmatprep.subr.mxu0 0.0
          %1076 = vmatpush1.msra.mxu0 0.0
          %1077 = vmatprep.subr.mxu0 0.0
          %1078 = vmatpush1.msra.mxu0 0.0
          %1079 = vmatprep.subr.mxu0 0.0
          %1080 = vmatpush1.msra.mxu0 0.0
          %1081 = vmatprep.subr.mxu0 0.0
          %1082 = vmatpush1.msra.mxu0 0.0
          %1083 = vmatprep.subr.mxu0 0.0
          %1084 = vmatpush1.msra.mxu0 0.0
          %1085 = vmatprep.subr.mxu0 0.0
          %1086 = vmatpush1.msra.mxu0 0.0
          %1087 = vmatprep.subr.mxu0 0.0
          %1088 = vmatpush1.msra.mxu0 0.0
          %1089 = vmatprep.subr.mxu0 0.0
          %1090 = vmatpush1.msra.mxu0 0.0
          %1091 = vmatprep.subr.mxu0 0.0
          %1092 = vmatpush1.msra.mxu0 0.0
          %1093 = vmatprep.mubr.f32.mxu0 0.0
          %1094 = vmatmul.mubr.f32.gmra.mrb[0].mxu0 %v979
          %v1095 = vpop.f32.mrb[0].mxu0
          %v1096 = vadd.f32 %v900, %v1095
          %v1097 = vpop.f32.mrb[0].mxu0
          %1098 = vmatprep.mubr.f32.mxu0 0.0
          %1099 = vmatmul.mubr.f32.gmra.mrb[0].mxu0 %v982
          %v1100 = vpop.f32.mrb[0].mxu0
          %v1101 = vadd.f32 %v905, %v1100
          %v1102 = vpop.f32.mrb[0].mxu0
          %1103 = vmatprep.mubr.f32.mxu0 0.0
          %1104 = vmatmul.mubr.f32.gmra.mrb[0].mxu0 %v985
          %v1105 = vpop.f32.mrb[0].mxu0
          %v1106 = vadd.f32 %v910, %v1105
          %v1107 = vpop.f32.mrb[0].mxu0
          %1108 = vmatprep.mubr.f32.mxu0 0.0
          %1109 = vmatmul.mubr.f32.gmra.mrb[0].mxu0 %v988
          %v1110 = vpop.f32.mrb[0].mxu0
          %v1111 = vadd.f32 %v915, %v1110
          %v1112 = vpop.f32.mrb[0].mxu0
          %1113 = vmatprep.mubr.f32.mxu0 0.0
          %1114 = vmatmul.mubr.f32.gmra.mrb[0].mxu0 %v991
          %v1115 = vpop.f32.mrb[0].mxu0
          %v1116 = vadd.f32 %v920, %v1115
          %v1117 = vpop.f32.mrb[0].mxu0
          %1118 = vmatprep.mubr.f32.mxu0 0.0
          %1119 = vmatmul.mubr.f32.gmra.mrb[0].mxu0 %v994
          %v1120 = vpop.f32.mrb[0].mxu0
          %v1121 = vadd.f32 %v925, %v1120
          %v1122 = vpop.f32.mrb[0].mxu0
          %1123 = vmatprep.mubr.f32.mxu0 0.0
          %1124 = vmatmul.mubr.f32.gmra.mrb[0].mxu0 %v997
          %v1125 = vpop.f32.mrb[0].mxu0
          %v1126 = vadd.f32 %v930, %v1125
          %v1127 = vpop.f32.mrb[0].mxu0
          %1128 = vmatprep.mubr.f32.mxu0 0.0
          %1129 = vmatmul.mubr.f32.gmra.mrb[0].mxu0 %v1000
          %v1130 = vpop.f32.mrb[0].mxu0
          %v1131 = vadd.f32 %v935, %v1130
          %v1132 = vpop.f32.mrb[0].mxu0
          %1133 = vmatprep.mubr.f32.mxu0 0.0
          %1134 = vmatmul.mubr.f32.gmra.mrb[0].mxu0 %v1003
          %v1135 = vpop.f32.mrb[0].mxu0
          %v1136 = vadd.f32 %v940, %v1135
          %v1137 = vpop.f32.mrb[0].mxu0
          %1138 = vmatprep.mubr.f32.mxu0 0.0
          %1139 = vmatmul.mubr.f32.gmra.mrb[0].mxu0 %v1006
          %v1140 = vpop.f32.mrb[0].mxu0
          %v1141 = vadd.f32 %v945, %v1140
          %v1142 = vpop.f32.mrb[0].mxu0
          %1143 = vmatprep.mubr.f32.mxu0 0.0
          %1144 = vmatmul.mubr.f32.gmra.mrb[0].mxu0 %v1009
          %v1145 = vpop.f32.mrb[0].mxu0
          %v1146 = vadd.f32 %v950, %v1145
          %v1147 = vpop.f32.mrb[0].mxu0
          %1148 = vmatprep.mubr.f32.mxu0 0.0
          %1149 = vmatmul.mubr.f32.gmra.mrb[0].mxu0 %v1012
          %v1150 = vpop.f32.mrb[0].mxu0
          %v1151 = vadd.f32 %v955, %v1150
          %v1152 = vpop.f32.mrb[0].mxu0
          %1153 = vmatprep.mubr.f32.mxu0 0.0
          %1154 = vmatmul.mubr.f32.gmra.mrb[0].mxu0 %v1015
          %v1155 = vpop.f32.mrb[0].mxu0
          %v1156 = vadd.f32 %v960, %v1155
          %v1157 = vpop.f32.mrb[0].mxu0
          %1158 = vmatprep.mubr.f32.mxu0 0.0
          %1159 = vmatmul.mubr.f32.gmra.mrb[0].mxu0 %v1018
          %v1160 = vpop.f32.mrb[0].mxu0
          %v1161 = vadd.f32 %v965, %v1160
          %v1162 = vpop.f32.mrb[0].mxu0
          %1163 = vmatprep.mubr.f32.mxu0 0.0
          %1164 = vmatmul.mubr.f32.gmra.mrb[0].mxu0 %v1021
          %v1165 = vpop.f32.mrb[0].mxu0
          %v1166 = vadd.f32 %v970, %v1165
          %v1167 = vpop.f32.mrb[0].mxu0
          %1168 = vmatprep.mubr.f32.mxu0 0.0
          %1169 = vmatmul.mubr.f32.gmra.mrb[0].mxu0 %v1024
          %v1170 = vpop.f32.mrb[0].mxu0
          %v1171 = vadd.f32 %v975, %v1170
          %v1172 = vpop.f32.mrb[0].mxu0
          %1173 = vdwg.mxu0
          %v1174 = vld [vmem:[%s5] sm:$0x1]
          %v1176 = vlaneseq
          %v1177 = vshrl.u32 %v1176, 7
          %v1178 = vsub.s32 0, %v1177
          %v1179 = vrot.slane %v1174, %v1178
          %v1181 = vadd.f32 %v1096, %v1179
          %v1182 = vadd.f32 %v1101, %v1179
          %v1183 = vadd.f32 %v1106, %v1179
          %v1184 = vadd.f32 %v1111, %v1179
          %v1185 = vadd.f32 %v1116, %v1179
          %v1186 = vadd.f32 %v1121, %v1179
          %v1187 = vadd.f32 %v1126, %v1179
          %v1188 = vadd.f32 %v1131, %v1179
          %v1189 = vadd.f32 %v1136, %v1179
          %v1190 = vadd.f32 %v1141, %v1179
          %v1191 = vadd.f32 %v1146, %v1179
          %v1192 = vadd.f32 %v1151, %v1179
          %v1193 = vadd.f32 %v1156, %v1179
          %v1194 = vadd.f32 %v1161, %v1179
          %v1195 = vadd.f32 %v1166, %v1179
          %v1196 = vadd.f32 %v1171, %v1179
          %v1197 = vmax.f32 %v1181, 0.0
          %v1198 = vmax.f32 %v1182, 0.0
          %v1199 = vmax.f32 %v1183, 0.0
          %v1200 = vmax.f32 %v1184, 0.0
          %v1201 = vmax.f32 %v1185, 0.0
          %v1202 = vmax.f32 %v1186, 0.0
          %v1203 = vmax.f32 %v1187, 0.0
          %v1204 = vmax.f32 %v1188, 0.0
          %v1205 = vmax.f32 %v1189, 0.0
          %v1206 = vmax.f32 %v1190, 0.0
          %v1207 = vmax.f32 %v1191, 0.0
          %v1208 = vmax.f32 %v1192, 0.0
          %v1209 = vmax.f32 %v1193, 0.0
          %v1210 = vmax.f32 %v1194, 0.0
          %v1211 = vmax.f32 %v1195, 0.0
          %v1212 = vmax.f32 %v1196, 0.0
          %v1213 = vld [vmem:[%s6] sm:$0xff]
          %v1214 = vld [vmem:[%s6 + $0x8] sm:$0xff]
          %vm1215 = vcmask 130048
          %v1217 = vsel %vm1215, %v1197, 0
          %v1220 = vsel %vm1215, %v1198, 0
          %v1223 = vsel %vm1215, %v1199, 0
          %v1226 = vsel %vm1215, %v1200, 0
          %v1229 = vsel %vm1215, %v1201, 0
          %v1232 = vsel %vm1215, %v1202, 0
          %v1235 = vsel %vm1215, %v1203, 0
          %v1238 = vsel %vm1215, %v1204, 0
          %v1241 = vsel %vm1215, %v1205, 0
          %v1244 = vsel %vm1215, %v1206, 0
          %v1247 = vsel %vm1215, %v1207, 0
          %v1250 = vsel %vm1215, %v1208, 0
          %v1253 = vsel %vm1215, %v1209, 0
          %v1256 = vsel %vm1215, %v1210, 0
          %v1259 = vsel %vm1215, %v1211, 0
          %v1262 = vsel %vm1215, %v1212, 0
          %1264 = vmatprep.subr.mxu0 0.0
          %1265 = vmatpush1.msra.mxu0 %v1213
          %1266 = vmatprep.subr.mxu0 0.0
          %1267 = vmatpush1.msra.mxu0 %v1214
          %1268 = vmatprep.subr.mxu0 0.0
          %1269 = vmatpush1.msra.mxu0 0.0
          %1270 = vmatprep.subr.mxu0 0.0
          %1271 = vmatpush1.msra.mxu0 0.0
          %1272 = vmatprep.subr.mxu0 0.0
          %1273 = vmatpush1.msra.mxu0 0.0
          %1274 = vmatprep.subr.mxu0 0.0
          %1275 = vmatpush1.msra.mxu0 0.0
          %1276 = vmatprep.subr.mxu0 0.0
          %1277 = vmatpush1.msra.mxu0 0.0
          %1278 = vmatprep.subr.mxu0 0.0
          %1279 = vmatpush1.msra.mxu0 0.0
          %1280 = vmatprep.subr.mxu0 0.0
          %1281 = vmatpush1.msra.mxu0 0.0
          %1282 = vmatprep.subr.mxu0 0.0
          %1283 = vmatpush1.msra.mxu0 0.0
          %1284 = vmatprep.subr.mxu0 0.0
          %1285 = vmatpush1.msra.mxu0 0.0
          %1286 = vmatprep.subr.mxu0 0.0
          %1287 = vmatpush1.msra.mxu0 0.0
          %1288 = vmatprep.subr.mxu0 0.0
          %1289 = vmatpush1.msra.mxu0 0.0
          %1290 = vmatprep.subr.mxu0 0.0
          %1291 = vmatpush1.msra.mxu0 0.0
          %1292 = vmatprep.subr.mxu0 0.0
          %1293 = vmatpush1.msra.mxu0 0.0
          %1294 = vmatprep.subr.mxu0 0.0
          %1295 = vmatpush1.msra.mxu0 0.0
          %1296 = vmatprep.subr.mxu0 0.0
          %1297 = vmatpush1.msra.mxu0 0.0
          %1298 = vmatprep.subr.mxu0 0.0
          %1299 = vmatpush1.msra.mxu0 0.0
          %1300 = vmatprep.subr.mxu0 0.0
          %1301 = vmatpush1.msra.mxu0 0.0
          %1302 = vmatprep.subr.mxu0 0.0
          %1303 = vmatpush1.msra.mxu0 0.0
          %1304 = vmatprep.subr.mxu0 0.0
          %1305 = vmatpush1.msra.mxu0 0.0
          %1306 = vmatprep.subr.mxu0 0.0
          %1307 = vmatpush1.msra.mxu0 0.0
          %1308 = vmatprep.subr.mxu0 0.0
          %1309 = vmatpush1.msra.mxu0 0.0
          %1310 = vmatprep.subr.mxu0 0.0
          %1311 = vmatpush1.msra.mxu0 0.0
          %1312 = vmatprep.subr.mxu0 0.0
          %1313 = vmatpush1.msra.mxu0 0.0
          %1314 = vmatprep.subr.mxu0 0.0
          %1315 = vmatpush1.msra.mxu0 0.0
          %1316 = vmatprep.subr.mxu0 0.0
          %1317 = vmatpush1.msra.mxu0 0.0
          %1318 = vmatprep.subr.mxu0 0.0
          %1319 = vmatpush1.msra.mxu0 0.0
          %1320 = vmatprep.subr.mxu0 0.0
          %1321 = vmatpush1.msra.mxu0 0.0
          %1322 = vmatprep.subr.mxu0 0.0
          %1323 = vmatpush1.msra.mxu0 0.0
          %1324 = vmatprep.subr.mxu0 0.0
          %1325 = vmatpush1.msra.mxu0 0.0
          %1326 = vmatprep.subr.mxu0 0.0
          %1327 = vmatpush1.msra.mxu0 0.0
          %1328 = vmatprep.mubr.f32.mxu0 0.0
          %1329 = vmatmul.mubr.f32.gmra.mrb[0].mxu0 %v1217
          %v1330 = vpop.f32.mrb[0].mxu0
          %v1331 = vadd.f32 0.0, %v1330
          %v1332 = vpop.f32.mrb[0].mxu0
          %1333 = vmatprep.mubr.f32.mxu0 0.0
          %1334 = vmatmul.mubr.f32.gmra.mrb[0].mxu0 %v1220
          %v1335 = vpop.f32.mrb[0].mxu0
          %v1336 = vadd.f32 0.0, %v1335
          %v1337 = vpop.f32.mrb[0].mxu0
          %1338 = vmatprep.mubr.f32.mxu0 0.0
          %1339 = vmatmul.mubr.f32.gmra.mrb[0].mxu0 %v1223
          %v1340 = vpop.f32.mrb[0].mxu0
          %v1341 = vadd.f32 0.0, %v1340
          %v1342 = vpop.f32.mrb[0].mxu0
          %1343 = vmatprep.mubr.f32.mxu0 0.0
          %1344 = vmatmul.mubr.f32.gmra.mrb[0].mxu0 %v1226
          %v1345 = vpop.f32.mrb[0].mxu0
          %v1346 = vadd.f32 0.0, %v1345
          %v1347 = vpop.f32.mrb[0].mxu0
          %1348 = vmatprep.mubr.f32.mxu0 0.0
          %1349 = vmatmul.mubr.f32.gmra.mrb[0].mxu0 %v1229
          %v1350 = vpop.f32.mrb[0].mxu0
          %v1351 = vadd.f32 0.0, %v1350
          %v1352 = vpop.f32.mrb[0].mxu0
          %1353 = vmatprep.mubr.f32.mxu0 0.0
          %1354 = vmatmul.mubr.f32.gmra.mrb[0].mxu0 %v1232
          %v1355 = vpop.f32.mrb[0].mxu0
          %v1356 = vadd.f32 0.0, %v1355
          %v1357 = vpop.f32.mrb[0].mxu0
          %1358 = vmatprep.mubr.f32.mxu0 0.0
          %1359 = vmatmul.mubr.f32.gmra.mrb[0].mxu0 %v1235
          %v1360 = vpop.f32.mrb[0].mxu0
          %v1361 = vadd.f32 0.0, %v1360
          %v1362 = vpop.f32.mrb[0].mxu0
          %1363 = vmatprep.mubr.f32.mxu0 0.0
          %1364 = vmatmul.mubr.f32.gmra.mrb[0].mxu0 %v1238
          %v1365 = vpop.f32.mrb[0].mxu0
          %v1366 = vadd.f32 0.0, %v1365
          %v1367 = vpop.f32.mrb[0].mxu0
          %1368 = vmatprep.mubr.f32.mxu0 0.0
          %1369 = vmatmul.mubr.f32.gmra.mrb[0].mxu0 %v1241
          %v1370 = vpop.f32.mrb[0].mxu0
          %v1371 = vadd.f32 0.0, %v1370
          %v1372 = vpop.f32.mrb[0].mxu0
          %1373 = vmatprep.mubr.f32.mxu0 0.0
          %1374 = vmatmul.mubr.f32.gmra.mrb[0].mxu0 %v1244
          %v1375 = vpop.f32.mrb[0].mxu0
          %v1376 = vadd.f32 0.0, %v1375
          %v1377 = vpop.f32.mrb[0].mxu0
          %1378 = vmatprep.mubr.f32.mxu0 0.0
          %1379 = vmatmul.mubr.f32.gmra.mrb[0].mxu0 %v1247
          %v1380 = vpop.f32.mrb[0].mxu0
          %v1381 = vadd.f32 0.0, %v1380
          %v1382 = vpop.f32.mrb[0].mxu0
          %1383 = vmatprep.mubr.f32.mxu0 0.0
          %1384 = vmatmul.mubr.f32.gmra.mrb[0].mxu0 %v1250
          %v1385 = vpop.f32.mrb[0].mxu0
          %v1386 = vadd.f32 0.0, %v1385
          %v1387 = vpop.f32.mrb[0].mxu0
          %1388 = vmatprep.mubr.f32.mxu0 0.0
          %1389 = vmatmul.mubr.f32.gmra.mrb[0].mxu0 %v1253
          %v1390 = vpop.f32.mrb[0].mxu0
          %v1391 = vadd.f32 0.0, %v1390
          %v1392 = vpop.f32.mrb[0].mxu0
          %1393 = vmatprep.mubr.f32.mxu0 0.0
          %1394 = vmatmul.mubr.f32.gmra.mrb[0].mxu0 %v1256
          %v1395 = vpop.f32.mrb[0].mxu0
          %v1396 = vadd.f32 0.0, %v1395
          %v1397 = vpop.f32.mrb[0].mxu0
          %1398 = vmatprep.mubr.f32.mxu0 0.0
          %1399 = vmatmul.mubr.f32.gmra.mrb[0].mxu0 %v1259
          %v1400 = vpop.f32.mrb[0].mxu0
          %v1401 = vadd.f32 0.0, %v1400
          %v1402 = vpop.f32.mrb[0].mxu0
          %1403 = vmatprep.mubr.f32.mxu0 0.0
          %1404 = vmatmul.mubr.f32.gmra.mrb[0].mxu0 %v1262
          %v1405 = vpop.f32.mrb[0].mxu0
          %v1406 = vadd.f32 0.0, %v1405
          %v1407 = vpop.f32.mrb[0].mxu0
          %1408 = vdwg.mxu0
          %v1409 = vpack.c.bf16 %v1336, %v1331
          %v1410 = vpack.c.bf16 %v1346, %v1341
          %v1411 = vpack.c.bf16 %v1356, %v1351
          %v1412 = vpack.c.bf16 %v1366, %v1361
          %v1413 = vpack.c.bf16 %v1376, %v1371
          %v1414 = vpack.c.bf16 %v1386, %v1381
          %v1415 = vpack.c.bf16 %v1396, %v1391
          %v1416 = vpack.c.bf16 %v1406, %v1401
          %v1425 = vunpack.c.l.b16 %v1409
          %v1426 = vunpack.c.h.b16 %v1409
          %v1427 = vunpack.c.l.b16 %v1410
          %v1428 = vunpack.c.h.b16 %v1410
          %v1429 = vunpack.c.l.b16 %v1411
          %v1430 = vunpack.c.h.b16 %v1411
          %v1431 = vunpack.c.l.b16 %v1412
          %v1432 = vunpack.c.h.b16 %v1412
          %v1433 = vunpack.c.l.b16 %v1413
          %v1434 = vunpack.c.h.b16 %v1413
          %v1435 = vunpack.c.l.b16 %v1414
          %v1436 = vunpack.c.h.b16 %v1414
          %v1437 = vunpack.c.l.b16 %v1415
          %v1438 = vunpack.c.h.b16 %v1415
          %v1439 = vunpack.c.l.b16 %v1416
          %v1440 = vunpack.c.h.b16 %v1416
          %v1441 = vpack.c.b16 %v1425, %v1425
          %v1442 = vpack.c.b16 %v1426, %v1426
          %v1443 = vpack.c.b16 %v1427, %v1427
          %v1444 = vpack.c.b16 %v1428, %v1428
          %v1445 = vpack.c.b16 %v1429, %v1429
          %v1446 = vpack.c.b16 %v1430, %v1430
          %v1447 = vpack.c.b16 %v1431, %v1431
          %v1448 = vpack.c.b16 %v1432, %v1432
          %v1449 = vpack.c.b16 %v1433, %v1433
          %v1450 = vpack.c.b16 %v1434, %v1434
          %v1451 = vpack.c.b16 %v1435, %v1435
          %v1452 = vpack.c.b16 %v1436, %v1436
          %v1453 = vpack.c.b16 %v1437, %v1437
          %v1454 = vpack.c.b16 %v1438, %v1438
          %v1455 = vpack.c.b16 %v1439, %v1439
          %v1456 = vpack.c.b16 %v1440, %v1440
          %vm1473 = vcmask 27648
          %1474 = vst.msk [vmem:[%s475] sm:$0xf] %vm1473, %v1441
          %1475 = vst.msk [vmem:[%s475 + $0x4] sm:$0xf] %vm1473, %v1442
          %1476 = vst.msk [vmem:[%s475 + $0x8] sm:$0xf] %vm1473, %v1443
          %1477 = vst.msk [vmem:[%s475 + $0xc] sm:$0xf] %vm1473, %v1444
          %1478 = vst.msk [vmem:[%s475 + $0x10] sm:$0xf] %vm1473, %v1445
          %1479 = vst.msk [vmem:[%s475 + $0x14] sm:$0xf] %vm1473, %v1446
          %1480 = vst.msk [vmem:[%s475 + $0x18] sm:$0xf] %vm1473, %v1447
          %1481 = vst.msk [vmem:[%s475 + $0x1c] sm:$0xf] %vm1473, %v1448
          %1482 = vst.msk [vmem:[%s475 + $0x20] sm:$0xf] %vm1473, %v1449
          %1483 = vst.msk [vmem:[%s475 + $0x24] sm:$0xf] %vm1473, %v1450
          %1484 = vst.msk [vmem:[%s475 + $0x28] sm:$0xf] %vm1473, %v1451
          %1485 = vst.msk [vmem:[%s475 + $0x2c] sm:$0xf] %vm1473, %v1452
          %1486 = vst.msk [vmem:[%s475 + $0x30] sm:$0xf] %vm1473, %v1453
          %1487 = vst.msk [vmem:[%s475 + $0x34] sm:$0xf] %vm1473, %v1454
          %1488 = vst.msk [vmem:[%s475 + $0x38] sm:$0xf] %vm1473, %v1455
          %1489 = vst.msk [vmem:[%s475 + $0x3c] sm:$0xf] %vm1473, %v1456
          %v1490 = vld [vmem:[%s7] sm:$0xff]
          %v1491 = vld [vmem:[%s7 + $0x8] sm:$0xff]
          %v1492 = vld [vmem:[%s8] sm:$0x1]
          %v1494 = vlaneseq
          %v1495 = vshrl.u32 %v1494, 7
          %v1496 = vsub.s32 0, %v1495
          %v1497 = vrot.slane %v1492, %v1496
          %1499 = vmatprep.subr.mxu0 0.0
          %1500 = vmatpush1.msra.mxu0 %v1490
          %1501 = vmatprep.subr.mxu0 0.0
          %1502 = vmatpush1.msra.mxu0 %v1491
          %1503 = vmatprep.subr.mxu0 0.0
          %1504 = vmatpush1.msra.mxu0 0.0
          %1505 = vmatprep.subr.mxu0 0.0
          %1506 = vmatpush1.msra.mxu0 0.0
          %1507 = vmatprep.subr.mxu0 0.0
          %1508 = vmatpush1.msra.mxu0 0.0
          %1509 = vmatprep.subr.mxu0 0.0
          %1510 = vmatpush1.msra.mxu0 0.0
          %1511 = vmatprep.subr.mxu0 0.0
          %1512 = vmatpush1.msra.mxu0 0.0
          %1513 = vmatprep.subr.mxu0 0.0
          %1514 = vmatpush1.msra.mxu0 0.0
          %1515 = vmatprep.subr.mxu0 0.0
          %1516 = vmatpush1.msra.mxu0 0.0
          %1517 = vmatprep.subr.mxu0 0.0
          %1518 = vmatpush1.msra.mxu0 0.0
          %1519 = vmatprep.subr.mxu0 0.0
          %1520 = vmatpush1.msra.mxu0 0.0
          %1521 = vmatprep.subr.mxu0 0.0
          %1522 = vmatpush1.msra.mxu0 0.0
          %1523 = vmatprep.subr.mxu0 0.0
          %1524 = vmatpush1.msra.mxu0 0.0
          %1525 = vmatprep.subr.mxu0 0.0
          %1526 = vmatpush1.msra.mxu0 0.0
          %1527 = vmatprep.subr.mxu0 0.0
          %1528 = vmatpush1.msra.mxu0 0.0
          %1529 = vmatprep.subr.mxu0 0.0
          %1530 = vmatpush1.msra.mxu0 0.0
          %1531 = vmatprep.subr.mxu0 0.0
          %1532 = vmatpush1.msra.mxu0 0.0
          %1533 = vmatprep.subr.mxu0 0.0
          %1534 = vmatpush1.msra.mxu0 0.0
          %1535 = vmatprep.subr.mxu0 0.0
          %1536 = vmatpush1.msra.mxu0 0.0
          %1537 = vmatprep.subr.mxu0 0.0
          %1538 = vmatpush1.msra.mxu0 0.0
          %1539 = vmatprep.subr.mxu0 0.0
          %1540 = vmatpush1.msra.mxu0 0.0
          %1541 = vmatprep.subr.mxu0 0.0
          %1542 = vmatpush1.msra.mxu0 0.0
          %1543 = vmatprep.subr.mxu0 0.0
          %1544 = vmatpush1.msra.mxu0 0.0
          %1545 = vmatprep.subr.mxu0 0.0
          %1546 = vmatpush1.msra.mxu0 0.0
          %1547 = vmatprep.subr.mxu0 0.0
          %1548 = vmatpush1.msra.mxu0 0.0
          %1549 = vmatprep.subr.mxu0 0.0
          %1550 = vmatpush1.msra.mxu0 0.0
          %1551 = vmatprep.subr.mxu0 0.0
          %1552 = vmatpush1.msra.mxu0 0.0
          %1553 = vmatprep.subr.mxu0 0.0
          %1554 = vmatpush1.msra.mxu0 0.0
          %1555 = vmatprep.subr.mxu0 0.0
          %1556 = vmatpush1.msra.mxu0 0.0
          %1557 = vmatprep.subr.mxu0 0.0
          %1558 = vmatpush1.msra.mxu0 0.0
          %1559 = vmatprep.subr.mxu0 0.0
          %1560 = vmatpush1.msra.mxu0 0.0
          %1561 = vmatprep.subr.mxu0 0.0
          %1562 = vmatpush1.msra.mxu0 0.0
          %1563 = vmatprep.mubr.f32.mxu0 0.0
          %1564 = vmatmul.mubr.f32.gmra.mrb[0].mxu0 %v1217
          %v1565 = vpop.f32.mrb[0].mxu0
          %v1566 = vadd.f32 %v1497, %v1565
          %v1567 = vpop.f32.mrb[0].mxu0
          %1568 = vmatprep.mubr.f32.mxu0 0.0
          %1569 = vmatmul.mubr.f32.gmra.mrb[0].mxu0 %v1220
          %v1570 = vpop.f32.mrb[0].mxu0
          %v1571 = vadd.f32 %v1497, %v1570
          %v1572 = vpop.f32.mrb[0].mxu0
          %1573 = vmatprep.mubr.f32.mxu0 0.0
          %1574 = vmatmul.mubr.f32.gmra.mrb[0].mxu0 %v1223
          %v1575 = vpop.f32.mrb[0].mxu0
          %v1576 = vadd.f32 %v1497, %v1575
          %v1577 = vpop.f32.mrb[0].mxu0
          %1578 = vmatprep.mubr.f32.mxu0 0.0
          %1579 = vmatmul.mubr.f32.gmra.mrb[0].mxu0 %v1226
          %v1580 = vpop.f32.mrb[0].mxu0
          %v1581 = vadd.f32 %v1497, %v1580
          %v1582 = vpop.f32.mrb[0].mxu0
          %1583 = vmatprep.mubr.f32.mxu0 0.0
          %1584 = vmatmul.mubr.f32.gmra.mrb[0].mxu0 %v1229
          %v1585 = vpop.f32.mrb[0].mxu0
          %v1586 = vadd.f32 %v1497, %v1585
          %v1587 = vpop.f32.mrb[0].mxu0
          %1588 = vmatprep.mubr.f32.mxu0 0.0
          %1589 = vmatmul.mubr.f32.gmra.mrb[0].mxu0 %v1232
          %v1590 = vpop.f32.mrb[0].mxu0
          %v1591 = vadd.f32 %v1497, %v1590
          %v1592 = vpop.f32.mrb[0].mxu0
          %1593 = vmatprep.mubr.f32.mxu0 0.0
          %1594 = vmatmul.mubr.f32.gmra.mrb[0].mxu0 %v1235
          %v1595 = vpop.f32.mrb[0].mxu0
          %v1596 = vadd.f32 %v1497, %v1595
          %v1597 = vpop.f32.mrb[0].mxu0
          %1598 = vmatprep.mubr.f32.mxu0 0.0
          %1599 = vmatmul.mubr.f32.gmra.mrb[0].mxu0 %v1238
          %v1600 = vpop.f32.mrb[0].mxu0
          %v1601 = vadd.f32 %v1497, %v1600
          %v1602 = vpop.f32.mrb[0].mxu0
          %1603 = vmatprep.mubr.f32.mxu0 0.0
          %1604 = vmatmul.mubr.f32.gmra.mrb[0].mxu0 %v1241
          %v1605 = vpop.f32.mrb[0].mxu0
          %v1606 = vadd.f32 %v1497, %v1605
          %v1607 = vpop.f32.mrb[0].mxu0
          %1608 = vmatprep.mubr.f32.mxu0 0.0
          %1609 = vmatmul.mubr.f32.gmra.mrb[0].mxu0 %v1244
          %v1610 = vpop.f32.mrb[0].mxu0
          %v1611 = vadd.f32 %v1497, %v1610
          %v1612 = vpop.f32.mrb[0].mxu0
          %1613 = vmatprep.mubr.f32.mxu0 0.0
          %1614 = vmatmul.mubr.f32.gmra.mrb[0].mxu0 %v1247
          %v1615 = vpop.f32.mrb[0].mxu0
          %v1616 = vadd.f32 %v1497, %v1615
          %v1617 = vpop.f32.mrb[0].mxu0
          %1618 = vmatprep.mubr.f32.mxu0 0.0
          %1619 = vmatmul.mubr.f32.gmra.mrb[0].mxu0 %v1250
          %v1620 = vpop.f32.mrb[0].mxu0
          %v1621 = vadd.f32 %v1497, %v1620
          %v1622 = vpop.f32.mrb[0].mxu0
          %1623 = vmatprep.mubr.f32.mxu0 0.0
          %1624 = vmatmul.mubr.f32.gmra.mrb[0].mxu0 %v1253
          %v1625 = vpop.f32.mrb[0].mxu0
          %v1626 = vadd.f32 %v1497, %v1625
          %v1627 = vpop.f32.mrb[0].mxu0
          %1628 = vmatprep.mubr.f32.mxu0 0.0
          %1629 = vmatmul.mubr.f32.gmra.mrb[0].mxu0 %v1256
          %v1630 = vpop.f32.mrb[0].mxu0
          %v1631 = vadd.f32 %v1497, %v1630
          %v1632 = vpop.f32.mrb[0].mxu0
          %1633 = vmatprep.mubr.f32.mxu0 0.0
          %1634 = vmatmul.mubr.f32.gmra.mrb[0].mxu0 %v1259
          %v1635 = vpop.f32.mrb[0].mxu0
          %v1636 = vadd.f32 %v1497, %v1635
          %v1637 = vpop.f32.mrb[0].mxu0
          %1638 = vmatprep.mubr.f32.mxu0 0.0
          %1639 = vmatmul.mubr.f32.gmra.mrb[0].mxu0 %v1262
          %v1640 = vpop.f32.mrb[0].mxu0
          %v1641 = vadd.f32 %v1497, %v1640
          %v1642 = vpop.f32.mrb[0].mxu0
          %1643 = vdwg.mxu0
          %1644 = vst.msk [vmem:[%s481] sm:$0xff] %vm710, %v1566
          %1645 = vst.msk [vmem:[%s481 + $0x8] sm:$0xff] %vm710, %v1571
          %1646 = vst.msk [vmem:[%s481 + $0x10] sm:$0xff] %vm710, %v1576
          %1647 = vst.msk [vmem:[%s481 + $0x18] sm:$0xff] %vm710, %v1581
          %1648 = vst.msk [vmem:[%s481 + $0x20] sm:$0xff] %vm710, %v1586
          %1649 = vst.msk [vmem:[%s481 + $0x28] sm:$0xff] %vm710, %v1591
          %1650 = vst.msk [vmem:[%s481 + $0x30] sm:$0xff] %vm710, %v1596
          %1651 = vst.msk [vmem:[%s481 + $0x38] sm:$0xff] %vm710, %v1601
          %1652 = vst.msk [vmem:[%s481 + $0x40] sm:$0xff] %vm710, %v1606
          %1653 = vst.msk [vmem:[%s481 + $0x48] sm:$0xff] %vm710, %v1611
          %1654 = vst.msk [vmem:[%s481 + $0x50] sm:$0xff] %vm710, %v1616
          %1655 = vst.msk [vmem:[%s481 + $0x58] sm:$0xff] %vm710, %v1621
          %1656 = vst.msk [vmem:[%s481 + $0x60] sm:$0xff] %vm710, %v1626
          %1657 = vst.msk [vmem:[%s481 + $0x68] sm:$0xff] %vm710, %v1631
          %1658 = vst.msk [vmem:[%s481 + $0x70] sm:$0xff] %vm710, %v1636
          %1659 = vst.msk [vmem:[%s481 + $0x78] sm:$0xff] %vm710, %v1641
        $region102: #{tpu_custom_call.1} parent=89 // pred_fallthru
          _
        %s1660 = smul.u32 16, %s26
        %p1661 = scmp.lt.s32.totalorder %s1660, 31
        %s1662 = scalar_select %p1661, %s1660, 31
        %s1663 = smul.addr %s1662, 4
        %s1664 = scalar_lea.vmem %s9, %s1663
        %s1665 = smul.u32 16, %s26
        %p1666 = scmp.lt.s32.totalorder %s1665, 31
        %s1667 = scalar_select %p1666, %s1665, 31
        %s1668 = smul.addr %s1667, 8
        %s1669 = scalar_lea.vmem %s10, %s1668
        // Predicated region
        $region103: #{tpu_custom_call.1} parent=89 // pred_check
          %p1670 = pneg %p258
        $region104: #{tpu_custom_call.1} parent=89 // pred_check_branch
          %1672 = sbr.rel (%p1670) target = $region106
        $region105: #{tpu_custom_call.1} parent=89 // pred_region
          %s1673 = smul.u32 16, %s26
        $region106: #{tpu_custom_call.1} parent=89 // pred_fallthru
          _
        // Predicated region
        $region107: #{tpu_custom_call.1} parent=89 // pred_check
          %p1674 = pneg %p284
        $region108: #{tpu_custom_call.1} parent=89 // pred_check_branch
          %1676 = sbr.rel (%p1674) target = $region110
        $region109: #{tpu_custom_call.1} parent=89 // pred_region
          %s1677 = smul.u32 16, %s26
        $region110: #{tpu_custom_call.1} parent=89 // pred_fallthru
          _
      $region90: #{tpu_custom_call.1} parent=5 // pred_fallthru
        _
      %p1678 = scmp.le.s32.totalorder 2, %s17
      // Predicated region
      $region111: #{tpu_custom_call.1} parent=5 // pred_check
        %p1679 = pneg %p1678
      $region112: #{tpu_custom_call.1} parent=5 // pred_check_branch
        %1681 = sbr.rel (%p1679) target = $region114
      $region113: #{tpu_custom_call.1} parent=5 // pred_region
        %s1682 = ssub.s32 %s17, 2
        // Predicated region
        $region115: #{tpu_custom_call.1} parent=113 // pred_check
          %p1683 = pneg %p264
        $region116: #{tpu_custom_call.1} parent=113 // pred_check_branch
          %1685 = sbr.rel (%p1683) target = $region118
        $region117: #{tpu_custom_call.1} parent=113 // pred_region
          %s1686 = smul.u32 16, %s28
          %p1687 = scmp.lt.s32.totalorder %s1686, 31
          %s1688 = scalar_select %p1687, %s1686, 31
          %s1689 = smul.addr %s1688, 4
          %s1690 = scalar_lea.vmem %s9, %s1689
        $region118: #{tpu_custom_call.1} parent=113 // pred_fallthru
          _
        // Predicated region
        $region119: #{tpu_custom_call.1} parent=113 // pred_check
          %p1691 = pneg %p290
        $region120: #{tpu_custom_call.1} parent=113 // pred_check_branch
          %1693 = sbr.rel (%p1691) target = $region122
        $region121: #{tpu_custom_call.1} parent=113 // pred_region
          %s1694 = smul.u32 16, %s28
          %p1695 = scmp.lt.s32.totalorder %s1694, 31
          %s1696 = scalar_select %p1695, %s1694, 31
          %s1697 = smul.addr %s1696, 8
          %s1698 = scalar_lea.vmem %s10, %s1697
        $region122: #{tpu_custom_call.1} parent=113 // pred_fallthru
          _
      $region114: #{tpu_custom_call.1} parent=5 // pred_fallthru
        _
    $region6: #{tpu_custom_call.1} parent=1 // loop_footer
      %s21 = sadd.s32 1, %s17
    $region7: #{tpu_custom_call.1} parent=1 // loop_footer_branch
      %16 = sbr.rel target = $region3
    $region8: #{tpu_custom_call.1} parent=1 // loop_exit
      _

</llo_original>
